<compile_context>
chip_gen: v5e
topology: v5e:2x2
jax: 0.10.0
libtpu: 0.0.40
codegen_flags: <defaults>
</compile_context>

<pallas_src>
import functools

import jax
import jax.numpy as jnp
from jax import lax
from jax.experimental import pallas as pl
from jax.experimental.pallas import tpu as pltpu

BN_EPS = 1e-5
PAD = 128                # lane-dense width for hidden/class feature dims
NEG_INF = -1.0e30        # finite mask value for padded class columns


# ----------------------------------------------------------------------------
# Hardware-aware budgets.
# ----------------------------------------------------------------------------
def _vmem_capacity_bytes():
    try:
        return int(pltpu.get_tpu_info().vmem_capacity_bytes)
    except Exception:
        return 64 << 20      # conservative fallback (v7x per-core VMEM)


def _vmem_limit_bytes():
    cap = _vmem_capacity_bytes()
    return int(max(32 << 20, min(cap - (4 << 20), 120 << 20)))


# ----------------------------------------------------------------------------
# In-kernel math.
# ----------------------------------------------------------------------------
def _gelu_exact(x):
    # matches F.gelu default (erf formulation); f32 on the VPU / EUP.
    return 0.5 * x * (1.0 + lax.erf(x * jnp.float32(0.7071067811865476)))


def _gcn_layer(a_bf16, h_bf16, w_ref, b_ref):
    # (A @ H) @ W + b -- reassociated so the O(N^2) matmul contracts against
    # the narrow feature dim.  A/H feed the MXU in bf16 with f32 accumulation;
    # the small feature-mixing matmul, bias add and epilogue stay in f32.
    ah = jnp.dot(a_bf16, h_bf16, preferred_element_type=jnp.float32)
    return jnp.dot(ah, w_ref[...], preferred_element_type=jnp.float32) + b_ref[...]


def _log_softmax_padded(logits):
    # padded class columns carry a NEG_INF bias, so exp() underflows to 0 and
    # they do not perturb the normalization over the real classes.
    m = jnp.max(logits, axis=1, keepdims=True)
    z = logits - m
    lse = jnp.log(jnp.sum(jnp.exp(z), axis=1, keepdims=True))
    return z - lse


# ----------------------------------------------------------------------------
# Fused single-call kernel (whole problem VMEM resident) -- reads A once.
# ----------------------------------------------------------------------------
def gcn_fused_kernel(adj_ref, x_ref,
                     w1_ref, b1_ref, w2_ref, b2_ref, w3_ref, b3_ref,
                     w4_ref, b4_ref, out_ref):
    a = adj_ref[...]                                             # [N, N] bf16
    h = x_ref[...]                                               # [N, F_in] bf16

    h = _gelu_exact(_gcn_layer(a, h, w1_ref, b1_ref)).astype(jnp.bfloat16)
    h = _gelu_exact(_gcn_layer(a, h, w2_ref, b2_ref)).astype(jnp.bfloat16)
    h = _gelu_exact(_gcn_layer(a, h, w3_ref, b3_ref)).astype(jnp.bfloat16)
    logits = _gcn_layer(a, h, w4_ref, b4_ref)                    # [N, 128]
    out_ref[...] = _log_softmax_padded(logits).astype(out_ref.dtype)


def _gcn_forward_fused(adj_bf16, x_bf16, folded, vmem_limit):
    n = x_bf16.shape[0]
    vmem = pl.BlockSpec(memory_space=pltpu.MemorySpace.VMEM)
    inputs = (adj_bf16, x_bf16) + folded
    return pl.pallas_call(
        gcn_fused_kernel,
        out_shape=jax.ShapeDtypeStruct((n, PAD), jnp.float32),
        in_specs=[vmem] * len(inputs),
        out_specs=vmem,
        compiler_params=pltpu.CompilerParams(vmem_limit_bytes=vmem_limit),
    )(*inputs)


# ----------------------------------------------------------------------------
# Row-tiled per-layer kernel -- streams bf16 A row tiles from HBM for graphs
# whose dense adjacency does not fit comfortably in VMEM.
# ----------------------------------------------------------------------------
def _gcn_layer_tiled_kernel(a_ref, h_ref, w_ref, b_ref, out_ref, *, last):
    y = _gcn_layer(a_ref[...], h_ref[...], w_ref, b_ref)
    if last:
        out_ref[...] = _log_softmax_padded(y).astype(out_ref.dtype)
    else:
        out_ref[...] = _gelu_exact(y).astype(out_ref.dtype)


def _gcn_layer_tiled(adj_bf16, h_bf16, w, b, *, last, tm, vmem_limit):
    n_pad = adj_bf16.shape[0]
    f_in = h_bf16.shape[1]
    f_out = w.shape[1]                                  # == PAD (lane-dense)
    out_dtype = jnp.float32 if last else jnp.bfloat16   # inter-layer H in bf16
    kernel = functools.partial(_gcn_layer_tiled_kernel, last=last)
    return pl.pallas_call(
        kernel,
        out_shape=jax.ShapeDtypeStruct((n_pad, f_out), out_dtype),
        grid_spec=pltpu.PrefetchScalarGridSpec(
            num_scalar_prefetch=0,
            grid=(n_pad // tm,),
            in_specs=[
                pl.BlockSpec((tm, n_pad), lambda i: (i, 0)),     # streamed A rows
                pl.BlockSpec((n_pad, f_in), lambda i: (0, 0)),   # resident H
                pl.BlockSpec((f_in, f_out), lambda i: (0, 0)),
                pl.BlockSpec((1, f_out), lambda i: (0, 0)),
            ],
            out_specs=pl.BlockSpec((tm, f_out), lambda i: (i, 0)),
        ),
        compiler_params=pltpu.CompilerParams(
            dimension_semantics=("parallel",),     # v7x megacore shards rows
            vmem_limit_bytes=vmem_limit),
    )(adj_bf16, h_bf16, w, b)


def _gcn_forward_tiled(adj_bf16, x_bf16, folded, tm, vmem_limit):
    w1, b1, w2, b2, w3, b3, w4, b4 = folded
    h = _gcn_layer_tiled(adj_bf16, x_bf16, w1, b1, last=False, tm=tm,
                         vmem_limit=vmem_limit)
    h = _gcn_layer_tiled(adj_bf16, h, w2, b2, last=False, tm=tm,
                         vmem_limit=vmem_limit)
    h = _gcn_layer_tiled(adj_bf16, h, w3, b3, last=False, tm=tm,
                         vmem_limit=vmem_limit)
    return _gcn_layer_tiled(adj_bf16, h, w4, b4, last=True, tm=tm,
                            vmem_limit=vmem_limit)


def _pick_row_tile(n, f_max, vmem_limit):
    # Budget counts everything that lives in VMEM per layer call, all double
    # buffered: streamed bf16 A row tile, resident bf16 H block, f32 weights
    # and bias, f32/bf16 output tile.  Prefer tm <= 256 (vreg pressure of the
    # f32 [tm,128] epilogue) and the largest tile that fits (fewer grid steps,
    # longer DMAs run closer to HBM roofline).
    margin = 2 << 20
    fixed = 2 * (n * f_max * 2) + 2 * (f_max * PAD * 4 + PAD * 4)
    n8 = max(8, -(-n // 8) * 8)
    for tm in (256, 128, 64, 32, 16, 8):
        if tm > n8:
            continue
        need = fixed + 2 * (tm * n * 2) + 2 * (tm * PAD * 4) + margin
        if need <= vmem_limit:
            return tm
    return 8


# ----------------------------------------------------------------------------
# Parameter preparation (trace-time, outside the kernels).
# ----------------------------------------------------------------------------
def _fold_bn(w, b, gamma, beta, run_mean, run_var):
    # Eval-mode BatchNorm folded into the conv weight/bias:
    #   y = (HW + b - rm) * g / sqrt(rv + eps) + be
    # => W' = W * s,  b' = (b - rm) * s + be,  with s = g / sqrt(rv + eps)
    s = gamma / jnp.sqrt(run_var + BN_EPS)
    return w * s, (b - run_mean) * s + beta


def _pad_cols(w, b, bias_fill):
    fo = w.shape[1]
    if fo >= PAD:
        return w, b
    wp = jnp.zeros((w.shape[0], PAD), jnp.float32).at[:, :fo].set(w)
    bp = jnp.full((1, PAD), bias_fill, jnp.float32).at[:, :fo].set(b)
    return wp, bp


def _pad_rows(w):
    fi = w.shape[0]
    if fi >= PAD:
        return w
    return jnp.zeros((PAD, w.shape[1]), jnp.float32).at[:fi, :].set(w)


def _prepare_weights(params):
    (w1, b1, g1, be1, rm1, rv1,
     w2, b2, g2, be2, rm2, rv2,
     w3, b3, g3, be3, rm3, rv3,
     w4, b4) = params
    w1f, b1f = _fold_bn(w1, b1, g1, be1, rm1, rv1)
    w2f, b2f = _fold_bn(w2, b2, g2, be2, rm2, rv2)
    w3f, b3f = _fold_bn(w3, b3, g3, be3, rm3, rv3)
    # Lane-pad every hidden width to 128 (zeros: exact, since GELU(0)=0 and the
    # padded input rows of the next W are zero) and the class width to 128
    # (NEG_INF bias so padded classes vanish in the log-softmax).
    w1p, b1p = _pad_cols(w1f, b1f, bias_fill=0.0)
    w2p, b2p = _pad_cols(_pad_rows(w2f), b2f, bias_fill=0.0)
    w3p, b3p = _pad_cols(_pad_rows(w3f), b3f, bias_fill=0.0)
    w4p, b4p = _pad_cols(_pad_rows(w4), b4, bias_fill=NEG_INF)
    return (w1p, b1p, w2p, b2p, w3p, b3p, w4p, b4p)


# ----------------------------------------------------------------------------
# Forward entry point.
# ----------------------------------------------------------------------------
def gcn_forward(adj, x, params, num_classes, *, force_tiled=False, row_tile=None):
    n, f_in = x.shape
    folded = _prepare_weights(params)

    # For a fixed graph, pass a pre-cast bf16 adjacency so the N^2 f32->bf16
    # cast (≈6N^2 bytes of HBM traffic) is not repeated every call.
    adj_bf16 = adj if adj.dtype == jnp.bfloat16 else adj.astype(jnp.bfloat16)
    x_bf16 = x.astype(jnp.bfloat16)

    vmem_limit = _vmem_limit_bytes()

    # Fused path reads A once; tiled path reads it 4x.  Keep fused as long as
    # the resident footprint stays well inside the scoped VMEM budget.
    fused_bytes = (2 * n * n                # bf16 A
                   + 2 * n * f_in           # bf16 X
                   + 4 * n * PAD * 3        # f32 layer temporaries (rough)
                   + 4 * n * PAD            # f32 output
                   + 8 * PAD * PAD * 4)     # weights (generous)
    fused_ok = fused_bytes <= int(0.75 * vmem_limit)

    if force_tiled or not fused_ok:
        f_max = max(f_in, PAD)
        tm = row_tile if row_tile is not None else _pick_row_tile(n, f_max, vmem_limit)
        n_pad = -(-n // tm) * tm            # pad N so the grid drops no rows
        if n_pad != n:
            adj_p = jnp.zeros((n_pad, n_pad), jnp.bfloat16).at[:n, :n].set(adj_bf16)
            x_p = jnp.zeros((n_pad, f_in), jnp.bfloat16).at[:n, :].set(x_bf16)
        else:
            adj_p, x_p = adj_bf16, x_bf16
        out = _gcn_forward_tiled(adj_p, x_p, folded, tm, vmem_limit)
        return out[:n, :num_classes]

    out = _gcn_forward_fused(adj_bf16, x_bf16, folded, vmem_limit)
    return out[:, :num_classes]


# ----------------------------------------------------------------------------
# Reference-style graph / parameter construction.
# ----------------------------------------------------------------------------
def normalized_adjacency(edge_index, num_nodes):
    # NOTE: symmetrizes the edge list; matches GCNConv on an undirected graph.
    src, dst = edge_index
    a = jnp.zeros((num_nodes, num_nodes), jnp.float32)
    a = a.at[src, dst].set(1.0)
    a = jnp.maximum(a, a.T)                                      # undirected
    a = jnp.maximum(a, jnp.eye(num_nodes, dtype=jnp.float32))    # self loops
    deg = a.sum(axis=1)
    d_inv_sqrt = jnp.where(deg > 0, 1.0 / jnp.sqrt(deg), 0.0)
    return a * d_inv_sqrt[:, None] * d_inv_sqrt[None, :]


def glorot(key, fan_in, fan_out):
    limit = jnp.sqrt(6.0 / (fan_in + fan_out))
    return jax.random.uniform(key, (fan_in, fan_out), jnp.float32, -limit, limit)


def init_params(key, num_node_features, num_classes):
    dims = [(num_node_features, 16), (16, 32), (32, 64), (64, num_classes)]
    keys = jax.random.split(key, 8)
    params = []
    for i in range(3):
        fi, fo = dims[i]
        w = glorot(keys[2 * i], fi, fo)
        b = jnp.zeros((1, fo), jnp.float32)
        gamma = 1.0 + 0.1 * jax.random.normal(keys[2 * i + 1], (1, fo), jnp.float32)
        beta = jnp.zeros((1, fo), jnp.float32)
        run_mean = jnp.zeros((1, fo), jnp.float32)
        run_var = jnp.ones((1, fo), jnp.float32)
        params += [w, b, gamma, beta, run_mean, run_var]
    fi, fo = dims[3]
    params += [glorot(keys[6], fi, fo), jnp.zeros((1, fo), jnp.float32)]
    return tuple(params)


if __name__ == "__main__":
    key = jax.random.PRNGKey(0)
    k_feat, k_edge, k_param = jax.random.split(key, 3)

    num_nodes = 64
    num_node_features = 16
    num_classes = 2
    num_edges = 128

    x = jax.random.normal(k_feat, (num_nodes, num_node_features), jnp.float32)
    edge_index = jax.random.randint(k_edge, (2, num_edges), 0, num_nodes)
    adj = normalized_adjacency(edge_index, num_nodes)
    # Cast the (fixed-graph) adjacency to bf16 once, outside the forward.
    adj_bf16 = adj.astype(jnp.bfloat16)
    params = init_params(k_param, num_node_features, num_classes)

    # Fused single-call path (the right shape for this toy size).
    out = jax.block_until_ready(gcn_forward(adj_bf16, x, params, num_classes))
    assert out.shape == (num_nodes, num_classes)
    assert jnp.allclose(jnp.exp(out).sum(axis=1), 1.0, atol=1e-4)

    # Row-tiled streaming path (used automatically at large N); cross-check.
    out_tiled = jax.block_until_ready(
        gcn_forward(adj_bf16, x, params, num_classes,
                    force_tiled=True, row_tile=32))
    assert out_tiled.shape == (num_nodes, num_classes)
    assert jnp.allclose(jnp.exp(out_tiled).sum(axis=1), 1.0, atol=1e-4)
    assert jnp.allclose(out, out_tiled, atol=1e-3)

    print("KERNEL_OK")
</pallas_src>

<mosaic_0001>
module attributes {stable_mosaic.version = 11 : i64} {
  func.func @gcn_fused_kernel(%arg0: memref<64x64xbf16, #tpu.memory_space<vmem>>, %arg1: memref<64x16xbf16, #tpu.memory_space<vmem>>, %arg2: memref<16x128xf32, #tpu.memory_space<vmem>>, %arg3: memref<1x128xf32, #tpu.memory_space<vmem>>, %arg4: memref<128x128xf32, #tpu.memory_space<vmem>>, %arg5: memref<1x128xf32, #tpu.memory_space<vmem>>, %arg6: memref<128x128xf32, #tpu.memory_space<vmem>>, %arg7: memref<1x128xf32, #tpu.memory_space<vmem>>, %arg8: memref<128x128xf32, #tpu.memory_space<vmem>>, %arg9: memref<1x128xf32, #tpu.memory_space<vmem>>, %arg10: memref<64x128xf32, #tpu.memory_space<vmem>>) attributes {dimension_semantics = [], scalar_prefetch = 0 : i64, scratch_operands = 0 : i64, tpu.core_type = #tpu.core_type<tc>} {
    %c0 = arith.constant 0 : index
    %c0_0 = arith.constant 0 : index
    %0 = vector.load %arg0[%c0, %c0_0] : memref<64x64xbf16, #tpu.memory_space<vmem>>, vector<64x64xbf16>
    %c0_1 = arith.constant 0 : index
    %c0_2 = arith.constant 0 : index
    %1 = vector.load %arg1[%c0_1, %c0_2] : memref<64x16xbf16, #tpu.memory_space<vmem>>, vector<64x16xbf16>
    %cst = arith.constant dense<0.000000e+00> : vector<64x16xf32>
    %2 = tpu.matmul %0, %1, %cst {dimension_numbers = #tpu.dot_dimension_numbers<[1], [0], [0], [1], [0, 0, 1, 1], [], []>} : vector<64x64xbf16>, vector<64x16xbf16>, vector<64x16xf32> -> vector<64x16xf32>
    %c0_3 = arith.constant 0 : index
    %c0_4 = arith.constant 0 : index
    %3 = vector.load %arg2[%c0_3, %c0_4] : memref<16x128xf32, #tpu.memory_space<vmem>>, vector<16x128xf32>
    %cst_5 = arith.constant dense<0.000000e+00> : vector<64x128xf32>
    %4 = tpu.matmul %2, %3, %cst_5 {dimension_numbers = #tpu.dot_dimension_numbers<[1], [0], [0], [1], [0, 0, 1, 1], [], []>} : vector<64x16xf32>, vector<16x128xf32>, vector<64x128xf32> -> vector<64x128xf32>
    %c0_6 = arith.constant 0 : index
    %c0_7 = arith.constant 0 : index
    %5 = vector.load %arg3[%c0_6, %c0_7] : memref<1x128xf32, #tpu.memory_space<vmem>>, vector<1x128xf32>
    %6 = vector.broadcast %5 : vector<1x128xf32> to vector<64x128xf32>
    %7 = arith.addf %4, %6 : vector<64x128xf32>
    %cst_8 = arith.constant 5.000000e-01 : f32
    %8 = vector.broadcast %cst_8 : f32 to vector<64x128xf32>
    %9 = arith.mulf %8, %7 : vector<64x128xf32>
    %cst_9 = arith.constant 0.707106769 : f32
    %10 = vector.broadcast %cst_9 : f32 to vector<64x128xf32>
    %11 = arith.mulf %7, %10 : vector<64x128xf32>
    %12 = math.erf %11 : vector<64x128xf32>
    %cst_10 = arith.constant 1.000000e+00 : f32
    %13 = vector.broadcast %cst_10 : f32 to vector<64x128xf32>
    %14 = arith.addf %13, %12 : vector<64x128xf32>
    %15 = arith.mulf %9, %14 : vector<64x128xf32>
    %16 = arith.truncf %15 : vector<64x128xf32> to vector<64x128xbf16>
    %cst_11 = arith.constant dense<0.000000e+00> : vector<64x128xf32>
    %17 = tpu.matmul %0, %16, %cst_11 {dimension_numbers = #tpu.dot_dimension_numbers<[1], [0], [0], [1], [0, 0, 1, 1], [], []>} : vector<64x64xbf16>, vector<64x128xbf16>, vector<64x128xf32> -> vector<64x128xf32>
    %c0_12 = arith.constant 0 : index
    %c0_13 = arith.constant 0 : index
    %18 = vector.load %arg4[%c0_12, %c0_13] : memref<128x128xf32, #tpu.memory_space<vmem>>, vector<128x128xf32>
    %cst_14 = arith.constant dense<0.000000e+00> : vector<64x128xf32>
    %19 = tpu.matmul %17, %18, %cst_14 {dimension_numbers = #tpu.dot_dimension_numbers<[1], [0], [0], [1], [0, 0, 1, 1], [], []>} : vector<64x128xf32>, vector<128x128xf32>, vector<64x128xf32> -> vector<64x128xf32>
    %c0_15 = arith.constant 0 : index
    %c0_16 = arith.constant 0 : index
    %20 = vector.load %arg5[%c0_15, %c0_16] : memref<1x128xf32, #tpu.memory_space<vmem>>, vector<1x128xf32>
    %21 = vector.broadcast %20 : vector<1x128xf32> to vector<64x128xf32>
    %22 = arith.addf %19, %21 : vector<64x128xf32>
    %cst_17 = arith.constant 5.000000e-01 : f32
    %23 = vector.broadcast %cst_17 : f32 to vector<64x128xf32>
    %24 = arith.mulf %23, %22 : vector<64x128xf32>
    %cst_18 = arith.constant 0.707106769 : f32
    %25 = vector.broadcast %cst_18 : f32 to vector<64x128xf32>
    %26 = arith.mulf %22, %25 : vector<64x128xf32>
    %27 = math.erf %26 : vector<64x128xf32>
    %cst_19 = arith.constant 1.000000e+00 : f32
    %28 = vector.broadcast %cst_19 : f32 to vector<64x128xf32>
    %29 = arith.addf %28, %27 : vector<64x128xf32>
    %30 = arith.mulf %24, %29 : vector<64x128xf32>
    %31 = arith.truncf %30 : vector<64x128xf32> to vector<64x128xbf16>
    %cst_20 = arith.constant dense<0.000000e+00> : vector<64x128xf32>
    %32 = tpu.matmul %0, %31, %cst_20 {dimension_numbers = #tpu.dot_dimension_numbers<[1], [0], [0], [1], [0, 0, 1, 1], [], []>} : vector<64x64xbf16>, vector<64x128xbf16>, vector<64x128xf32> -> vector<64x128xf32>
    %c0_21 = arith.constant 0 : index
    %c0_22 = arith.constant 0 : index
    %33 = vector.load %arg6[%c0_21, %c0_22] : memref<128x128xf32, #tpu.memory_space<vmem>>, vector<128x128xf32>
    %cst_23 = arith.constant dense<0.000000e+00> : vector<64x128xf32>
    %34 = tpu.matmul %32, %33, %cst_23 {dimension_numbers = #tpu.dot_dimension_numbers<[1], [0], [0], [1], [0, 0, 1, 1], [], []>} : vector<64x128xf32>, vector<128x128xf32>, vector<64x128xf32> -> vector<64x128xf32>
    %c0_24 = arith.constant 0 : index
    %c0_25 = arith.constant 0 : index
    %35 = vector.load %arg7[%c0_24, %c0_25] : memref<1x128xf32, #tpu.memory_space<vmem>>, vector<1x128xf32>
    %36 = vector.broadcast %35 : vector<1x128xf32> to vector<64x128xf32>
    %37 = arith.addf %34, %36 : vector<64x128xf32>
    %cst_26 = arith.constant 5.000000e-01 : f32
    %38 = vector.broadcast %cst_26 : f32 to vector<64x128xf32>
    %39 = arith.mulf %38, %37 : vector<64x128xf32>
    %cst_27 = arith.constant 0.707106769 : f32
    %40 = vector.broadcast %cst_27 : f32 to vector<64x128xf32>
    %41 = arith.mulf %37, %40 : vector<64x128xf32>
    %42 = math.erf %41 : vector<64x128xf32>
    %cst_28 = arith.constant 1.000000e+00 : f32
    %43 = vector.broadcast %cst_28 : f32 to vector<64x128xf32>
    %44 = arith.addf %43, %42 : vector<64x128xf32>
    %45 = arith.mulf %39, %44 : vector<64x128xf32>
    %46 = arith.truncf %45 : vector<64x128xf32> to vector<64x128xbf16>
    %cst_29 = arith.constant dense<0.000000e+00> : vector<64x128xf32>
    %47 = tpu.matmul %0, %46, %cst_29 {dimension_numbers = #tpu.dot_dimension_numbers<[1], [0], [0], [1], [0, 0, 1, 1], [], []>} : vector<64x64xbf16>, vector<64x128xbf16>, vector<64x128xf32> -> vector<64x128xf32>
    %c0_30 = arith.constant 0 : index
    %c0_31 = arith.constant 0 : index
    %48 = vector.load %arg8[%c0_30, %c0_31] : memref<128x128xf32, #tpu.memory_space<vmem>>, vector<128x128xf32>
    %cst_32 = arith.constant dense<0.000000e+00> : vector<64x128xf32>
    %49 = tpu.matmul %47, %48, %cst_32 {dimension_numbers = #tpu.dot_dimension_numbers<[1], [0], [0], [1], [0, 0, 1, 1], [], []>} : vector<64x128xf32>, vector<128x128xf32>, vector<64x128xf32> -> vector<64x128xf32>
    %c0_33 = arith.constant 0 : index
    %c0_34 = arith.constant 0 : index
    %50 = vector.load %arg9[%c0_33, %c0_34] : memref<1x128xf32, #tpu.memory_space<vmem>>, vector<1x128xf32>
    %51 = vector.broadcast %50 : vector<1x128xf32> to vector<64x128xf32>
    %52 = arith.addf %49, %51 : vector<64x128xf32>
    %cst_35 = arith.constant dense<0xFF800000> : vector<64xf32>
    %53 = vector.multi_reduction <maximumf>, %52, %cst_35 [1] : vector<64x128xf32> to vector<64xf32>
    %54 = vector.shape_cast %53 : vector<64xf32> to vector<64x1xf32>
    %55 = vector.broadcast %54 : vector<64x1xf32> to vector<64x128xf32>
    %56 = arith.subf %52, %55 : vector<64x128xf32>
    %57 = math.exp %56 : vector<64x128xf32>
    %cst_36 = arith.constant dense<0.000000e+00> : vector<64xf32>
    %58 = vector.multi_reduction <add>, %57, %cst_36 [1] : vector<64x128xf32> to vector<64xf32>
    %59 = vector.shape_cast %58 : vector<64xf32> to vector<64x1xf32>
    %60 = math.log %59 : vector<64x1xf32>
    %61 = vector.broadcast %60 : vector<64x1xf32> to vector<64x128xf32>
    %62 = arith.subf %56, %61 : vector<64x128xf32>
    %c0_37 = arith.constant 0 : index
    %c0_38 = arith.constant 0 : index
    %63 = vector.load %arg10[%c0_37, %c0_38] : memref<64x128xf32, #tpu.memory_space<vmem>>, vector<64x128xf32>
    tpu.vector_store %arg10[%c0_37, %c0_38], %62 {strides = array<i32>} : memref<64x128xf32, #tpu.memory_space<vmem>>, vector<64x128xf32>,
    return
  }
}

</mosaic_0001>

<llo_original>
// kernel: tpu_custom_call.1
$region0: #{tpu_custom_call.1}
  #allocation0 [shape = 'u32[]', space=smem, size = 0x4, offset = 0x4, fixed_abs, tag = 'smem constant byte address 0x4 - core index']
  #allocation1 [shape = 'u32[72,128]{1,0:T(1,128)}', space=vmem, size = 0x9000, scoped, tag = 'internal scratch']
  %s0 = inlined_call_operand.vmem [shape: bf16[64,64], index: 0, kind: input, shape index: {}]
  %s1 = inlined_call_operand.vmem [shape: bf16[64,16], index: 1, kind: input, shape index: {}]
  %s2 = inlined_call_operand.hbm [shape: f32[16,128], index: 2, kind: input, shape index: {}]
  %s3 = inlined_call_operand.vmem [shape: f32[1,128], index: 3, kind: input, shape index: {}]
  %s4 = inlined_call_operand.hbm [shape: f32[128,128], index: 4, kind: input, shape index: {}]
  %s5 = inlined_call_operand.vmem [shape: f32[1,128], index: 5, kind: input, shape index: {}]
  %s6 = inlined_call_operand.hbm [shape: f32[128,128], index: 6, kind: input, shape index: {}]
  %s7 = inlined_call_operand.vmem [shape: f32[1,128], index: 7, kind: input, shape index: {}]
  %s8 = inlined_call_operand.hbm [shape: f32[128,128], index: 8, kind: input, shape index: {}]
  %s9 = inlined_call_operand.vmem [shape: f32[1,128], index: 9, kind: input, shape index: {}]
  %s10 = inlined_call_operand.hbm [shape: f32[64,128], index: 10, kind: output, shape index: {}]
  %s11 = sld [smem:[#allocation0]]
  $region66: #{tpu_custom_call.1} parent=0
    _
  %s13 = ssub.s32 1, %s11
  %s14 = scalar_select 0, %s13, %s11
  $region1: #{tpu_custom_call.1} parent=0
    #allocation2 [shape = 'u8[8192]{0}', space=vmem, size = 0x2000, scoped, tag = 'input window, operand 2, single buffered']
    #allocation3 [shape = 's32[1]{0}', space=sflag, size = 0x4, scoped, tag = 'scoped memory for tpu_custom_call.1']
    #allocation4 [shape = 's32[1]{0}', space=sflag, size = 0x4, scoped, tag = 'scoped memory for tpu_custom_call.1']
    #allocation5 [shape = 'u8[65536]{0}', space=vmem, size = 0x10000, scoped, tag = 'input window, operand 4, single buffered']
    #allocation6 [shape = 's32[1]{0}', space=sflag, size = 0x4, scoped, tag = 'scoped memory for tpu_custom_call.1']
    #allocation7 [shape = 'u8[65536]{0}', space=vmem, size = 0x10000, scoped, tag = 'input window, operand 6, single buffered']
    #allocation8 [shape = 'u8[65536]{0}', space=vmem, size = 0x10000, scoped, tag = 'input window, operand 8, single buffered']
    #allocation9 [shape = 's32[1]{0}', space=sflag, size = 0x4, scoped, tag = 'scoped memory for tpu_custom_call.1']
    #allocation10 [shape = 'u8[32768]{0}', space=vmem, size = 0x8000, scoped, tag = 'output window, operand 0, single buffered']
    %15 = vsyncpa [#allocation3], 0
    %16 = vsyncpa [#allocation6], 0
    %17 = vsyncpa [#allocation9], 0
    %18 = vsyncpa [#allocation4], 0
    // Predicated region
    $region2: #{tpu_custom_call.1} parent=1 // pred_check
      _
    $region3: #{tpu_custom_call.1} parent=1 // pred_check_branch
      %20 = sbr.rel (0) target = $region5
    $region4: #{tpu_custom_call.1} parent=1 // pred_region
      _
    $region5: #{tpu_custom_call.1} parent=1 // pred_fallthru
      _
    // Predicated region
    $region6: #{tpu_custom_call.1} parent=1 // pred_check
      _
    $region7: #{tpu_custom_call.1} parent=1 // pred_check_branch
      %22 = sbr.rel (0) target = $region9
    $region8: #{tpu_custom_call.1} parent=1 // pred_region
      _
    $region9: #{tpu_custom_call.1} parent=1 // pred_fallthru
      _
    // Predicated region
    $region10: #{tpu_custom_call.1} parent=1 // pred_check
      _
    $region11: #{tpu_custom_call.1} parent=1 // pred_check_branch
      %24 = sbr.rel (0) target = $region13
    $region12: #{tpu_custom_call.1} parent=1 // pred_region
      %26 = vsyncadd [#allocation3], 0
      %s27 = sshll.u32 %s2, 4
      %s28 = int_to_ptr.hbm [resolvable:$true] %s27
      %s29 = sshll.u32 [#allocation2], 4
      %s30 = int_to_ptr.vmem [resolvable:$true] %s29
      %35 = dma.hbm_to_vmem [thread:$0]  %s28, 256, %s30, [#allocation3], 128, 128, 8
    $region13: #{tpu_custom_call.1} parent=1 // pred_fallthru
      _
    // Predicated region
    $region14: #{tpu_custom_call.1} parent=1 // pred_check
      _
    $region15: #{tpu_custom_call.1} parent=1 // pred_check_branch
      %37 = sbr.rel (0) target = $region17
    $region16: #{tpu_custom_call.1} parent=1 // pred_region
      _
    $region17: #{tpu_custom_call.1} parent=1 // pred_fallthru
      _
    // Predicated region
    $region18: #{tpu_custom_call.1} parent=1 // pred_check
      _
    $region19: #{tpu_custom_call.1} parent=1 // pred_check_branch
      %39 = sbr.rel (0) target = $region21
    $region20: #{tpu_custom_call.1} parent=1 // pred_region
      %41 = vsyncadd [#allocation6], 0
      %s42 = sshll.u32 %s4, 4
      %s43 = int_to_ptr.hbm [resolvable:$true] %s42
      %s44 = sshll.u32 [#allocation5], 4
      %s45 = int_to_ptr.vmem [resolvable:$true] %s44
      %50 = dma.hbm_to_vmem [thread:$0]  %s43, 2048, %s45, [#allocation6], 128, 128, 8
    $region21: #{tpu_custom_call.1} parent=1 // pred_fallthru
      _
    // Predicated region
    $region22: #{tpu_custom_call.1} parent=1 // pred_check
      _
    $region23: #{tpu_custom_call.1} parent=1 // pred_check_branch
      %52 = sbr.rel (0) target = $region25
    $region24: #{tpu_custom_call.1} parent=1 // pred_region
      _
    $region25: #{tpu_custom_call.1} parent=1 // pred_fallthru
      _
    // Predicated region
    $region26: #{tpu_custom_call.1} parent=1 // pred_check
      _
    $region27: #{tpu_custom_call.1} parent=1 // pred_check_branch
      %54 = sbr.rel (0) target = $region29
    $region28: #{tpu_custom_call.1} parent=1 // pred_region
      %56 = vsyncadd [#allocation6], 0
      %s57 = sshll.u32 %s6, 4
      %s58 = int_to_ptr.hbm [resolvable:$true] %s57
      %s59 = sshll.u32 [#allocation7], 4
      %s60 = int_to_ptr.vmem [resolvable:$true] %s59
      %65 = dma.hbm_to_vmem [thread:$0]  %s58, 2048, %s60, [#allocation6], 128, 128, 8
    $region29: #{tpu_custom_call.1} parent=1 // pred_fallthru
      _
    // Predicated region
    $region30: #{tpu_custom_call.1} parent=1 // pred_check
      _
    $region31: #{tpu_custom_call.1} parent=1 // pred_check_branch
      %67 = sbr.rel (0) target = $region33
    $region32: #{tpu_custom_call.1} parent=1 // pred_region
      _
    $region33: #{tpu_custom_call.1} parent=1 // pred_fallthru
      _
    // Predicated region
    $region34: #{tpu_custom_call.1} parent=1 // pred_check
      _
    $region35: #{tpu_custom_call.1} parent=1 // pred_check_branch
      %69 = sbr.rel (0) target = $region37
    $region36: #{tpu_custom_call.1} parent=1 // pred_region
      %71 = vsyncadd [#allocation9], 0
      %s72 = sshll.u32 %s8, 4
      %s73 = int_to_ptr.hbm [resolvable:$true] %s72
      %s74 = sshll.u32 [#allocation8], 4
      %s75 = int_to_ptr.vmem [resolvable:$true] %s74
      %80 = dma.hbm_to_vmem [thread:$0]  %s73, 2048, %s75, [#allocation9], 128, 128, 8
    $region37: #{tpu_custom_call.1} parent=1 // pred_fallthru
      _
    // Predicated region
    $region38: #{tpu_custom_call.1} parent=1 // pred_check
      _
    $region39: #{tpu_custom_call.1} parent=1 // pred_check_branch
      %82 = sbr.rel (0) target = $region41
    $region40: #{tpu_custom_call.1} parent=1 // pred_region
      _
    $region41: #{tpu_custom_call.1} parent=1 // pred_fallthru
      _
    // Predicated region
    $region42: #{tpu_custom_call.1} parent=1 // pred_check
      _
    $region43: #{tpu_custom_call.1} parent=1 // pred_check_branch
      %84 = sbr.rel (0) target = $region45
    $region44: #{tpu_custom_call.1} parent=1 // pred_region
      %86 = dma.done [#allocation3], 256
    $region45: #{tpu_custom_call.1} parent=1 // pred_fallthru
      _
    // Predicated region
    $region46: #{tpu_custom_call.1} parent=1 // pred_check
      _
    $region47: #{tpu_custom_call.1} parent=1 // pred_check_branch
      %88 = sbr.rel (0) target = $region49
    $region48: #{tpu_custom_call.1} parent=1 // pred_region
      %90 = dma.done [#allocation6], 2048
    $region49: #{tpu_custom_call.1} parent=1 // pred_fallthru
      _
    // Predicated region
    $region50: #{tpu_custom_call.1} parent=1 // pred_check
      _
    $region51: #{tpu_custom_call.1} parent=1 // pred_check_branch
      %92 = sbr.rel (0) target = $region53
    $region52: #{tpu_custom_call.1} parent=1 // pred_region
      %94 = dma.done [#allocation6], 2048
    $region53: #{tpu_custom_call.1} parent=1 // pred_fallthru
      _
    // Predicated region
    $region54: #{tpu_custom_call.1} parent=1 // pred_check
      _
    $region55: #{tpu_custom_call.1} parent=1 // pred_check_branch
      %96 = sbr.rel (0) target = $region57
    $region56: #{tpu_custom_call.1} parent=1 // pred_region
      %98 = dma.done [#allocation9], 2048
    $region57: #{tpu_custom_call.1} parent=1 // pred_fallthru
      _
    %v100 = vld [vmem:[%s0] sm:$0xf]
    %v101 = vld [vmem:[%s0 + $0x4] sm:$0xf]
    %v102 = vld [vmem:[%s0 + $0x8] sm:$0xf]
    %v103 = vld [vmem:[%s0 + $0xc] sm:$0xf]
    %v104 = vld [vmem:[%s0 + $0x10] sm:$0xf]
    %v105 = vld [vmem:[%s0 + $0x14] sm:$0xf]
    %v106 = vld [vmem:[%s0 + $0x18] sm:$0xf]
    %v107 = vld [vmem:[%s0 + $0x1c] sm:$0xf]
    %v108 = vld [vmem:[%s1] sm:$0xf]
    %v109 = vld [vmem:[%s1 + $0x4] sm:$0xf]
    %v110 = vld [vmem:[%s1 + $0x8] sm:$0xf]
    %v111 = vld [vmem:[%s1 + $0xc] sm:$0xf]
    %v112 = vld [vmem:[%s1 + $0x10] sm:$0xf]
    %v113 = vld [vmem:[%s1 + $0x14] sm:$0xf]
    %v114 = vld [vmem:[%s1 + $0x18] sm:$0xf]
    %v115 = vld [vmem:[%s1 + $0x1c] sm:$0xf]
    %v124 = vunpack.c.l.b16 %v100
    %v125 = vunpack.c.l.b16 %v101
    %v126 = vunpack.c.l.b16 %v102
    %v127 = vunpack.c.l.b16 %v103
    %v128 = vunpack.c.l.b16 %v104
    %v129 = vunpack.c.l.b16 %v105
    %v130 = vunpack.c.l.b16 %v106
    %v131 = vunpack.c.l.b16 %v107
    %v132 = vpack.c.b16 %v125, %v124
    %v133 = vpack.c.b16 %v127, %v126
    %v134 = vpack.c.b16 %v129, %v128
    %v135 = vpack.c.b16 %v131, %v130
    %v144 = vunpack.c.l.b16 %v108
    %v145 = vunpack.c.l.b16 %v109
    %v146 = vunpack.c.l.b16 %v110
    %v147 = vunpack.c.l.b16 %v111
    %v148 = vunpack.c.l.b16 %v112
    %v149 = vunpack.c.l.b16 %v113
    %v150 = vunpack.c.l.b16 %v114
    %v151 = vunpack.c.l.b16 %v115
    %v152 = vpack.c.b16 %v145, %v144
    %v153 = vpack.c.b16 %v147, %v146
    %v154 = vpack.c.b16 %v149, %v148
    %v155 = vpack.c.b16 %v151, %v150
    %vm160 = vcmask 523264
    %v162 = vsel %vm160, %v132, 0
    %v165 = vsel %vm160, %v133, 0
    %v168 = vsel %vm160, %v134, 0
    %v171 = vsel %vm160, %v135, 0
    %173 = vmatpush.bf16.msra.mxu0 0
    %174 = vmatpush.bf16.msra.mxu0 0
    %175 = vmatpush.bf16.msra.mxu0 0
    %176 = vmatpush.bf16.msra.mxu0 0
    %177 = vmatpush.bf16.msra.mxu0 %v155
    %178 = vmatpush.bf16.msra.mxu0 %v154
    %179 = vmatpush.bf16.msra.mxu0 %v153
    %180 = vmatpush.bf16.msra.mxu0 %v152
    %181 = vmatmul.bf16.gmra.mxu0 %v162
    %v182 = vpop.f32.mrf.mxu0
    %v183 = vadd.f32 0.0, %v182
    %v184 = vpop.f32.mrf.mxu0
    %v185 = vadd.f32 0.0, %v184
    %186 = vmatmul.bf16.gmra.mxu0 %v165
    %v187 = vpop.f32.mrf.mxu0
    %v188 = vadd.f32 0.0, %v187
    %v189 = vpop.f32.mrf.mxu0
    %v190 = vadd.f32 0.0, %v189
    %191 = vmatmul.bf16.gmra.mxu0 %v168
    %v192 = vpop.f32.mrf.mxu0
    %v193 = vadd.f32 0.0, %v192
    %v194 = vpop.f32.mrf.mxu0
    %v195 = vadd.f32 0.0, %v194
    %196 = vmatmul.bf16.gmra.mxu0 %v171
    %v197 = vpop.f32.mrf.mxu0
    %v198 = vadd.f32 0.0, %v197
    %v199 = vpop.f32.mrf.mxu0
    %v200 = vadd.f32 0.0, %v199
    %201 = vdwg.mxu0
    %v202 = vld [vmem:[#allocation2] sm:$0xff]
    %v203 = vld [vmem:[#allocation2 + $0x8] sm:$0xff]
    %v204 = vld [vmem:[%s3] sm:$0x1]
    %v206 = vperm.slane %v204, 0
    %vm208 = vcmask 130048
    %v210 = vsel %vm208, %v183, 0
    %v213 = vsel %vm208, %v185, 0
    %v216 = vsel %vm208, %v188, 0
    %v219 = vsel %vm208, %v190, 0
    %v222 = vsel %vm208, %v193, 0
    %v225 = vsel %vm208, %v195, 0
    %v228 = vsel %vm208, %v198, 0
    %v231 = vsel %vm208, %v200, 0
    %233 = vmatpush.msra.mxu0 0.0
    %234 = vmatpush.msra.mxu0 0.0
    %235 = vmatpush.msra.mxu0 0.0
    %236 = vmatpush.msra.mxu0 0.0
    %237 = vmatpush.msra.mxu0 0.0
    %238 = vmatpush.msra.mxu0 0.0
    %239 = vmatpush.msra.mxu0 0.0
    %240 = vmatpush.msra.mxu0 0.0
    %241 = vmatpush.msra.mxu0 0.0
    %242 = vmatpush.msra.mxu0 0.0
    %243 = vmatpush.msra.mxu0 0.0
    %244 = vmatpush.msra.mxu0 0.0
    %245 = vmatpush.msra.mxu0 0.0
    %246 = vmatpush.msra.mxu0 0.0
    %247 = vmatpush.msra.mxu0 %v203
    %248 = vmatpush.msra.mxu0 %v202
    %249 = vmatmul.f32.gmra.mxu0 %v210
    %v250 = vpop.f32.mrf.mxu0
    %v251 = vadd.f32 %v206, %v250
    %252 = vmatmul.f32.gmra.mxu0 %v213
    %v253 = vpop.f32.mrf.mxu0
    %v254 = vadd.f32 %v206, %v253
    %255 = vmatmul.f32.gmra.mxu0 %v216
    %v256 = vpop.f32.mrf.mxu0
    %v257 = vadd.f32 %v206, %v256
    %258 = vmatmul.f32.gmra.mxu0 %v219
    %v259 = vpop.f32.mrf.mxu0
    %v260 = vadd.f32 %v206, %v259
    %261 = vmatmul.f32.gmra.mxu0 %v222
    %v262 = vpop.f32.mrf.mxu0
    %v263 = vadd.f32 %v206, %v262
    %264 = vmatmul.f32.gmra.mxu0 %v225
    %v265 = vpop.f32.mrf.mxu0
    %v266 = vadd.f32 %v206, %v265
    %267 = vmatmul.f32.gmra.mxu0 %v228
    %v268 = vpop.f32.mrf.mxu0
    %v269 = vadd.f32 %v206, %v268
    %270 = vmatmul.f32.gmra.mxu0 %v231
    %v271 = vpop.f32.mrf.mxu0
    %v272 = vadd.f32 %v206, %v271
    %273 = vdwg.mxu0
    %v274 = vmul.f32 %v251, 0.5
    %v275 = vmul.f32 %v254, 0.5
    %v276 = vmul.f32 %v257, 0.5
    %v277 = vmul.f32 %v260, 0.5
    %v278 = vmul.f32 %v263, 0.5
    %v279 = vmul.f32 %v266, 0.5
    %v280 = vmul.f32 %v269, 0.5
    %v281 = vmul.f32 %v272, 0.5
    %v282 = vmul.f32 %v251, 0.70710677
    %v283 = vmul.f32 %v254, 0.70710677
    %v284 = vmul.f32 %v257, 0.70710677
    %v285 = vmul.f32 %v260, 0.70710677
    %v286 = vmul.f32 %v263, 0.70710677
    %v287 = vmul.f32 %v266, 0.70710677
    %v288 = vmul.f32 %v269, 0.70710677
    %v289 = vmul.f32 %v272, 0.70710677
    %v290 = vmul.f32 %v282, %v282
    %v291 = vmin.f32 16.0, %v290
    %v292 = vmul.f32 %v291, 2.1237322e-06
    %v293 = vadd.f32 %v292, 0.00028619796
    %v294 = vmul.f32 %v291, %v293
    %v295 = vadd.f32 %v294, 0.0036580483
    %v296 = vmul.f32 %v291, %v295
    %v297 = vadd.f32 %v296, 0.05243302
    %v298 = vmul.f32 %v291, %v297
    %v299 = vadd.f32 %v298, 0.18741608
    %v300 = vmul.f32 %v291, %v299
    %v301 = vadd.f32 %v300, 1.1283791
    %v302 = vmul.f32 %v282, %v301
    %v303 = vmul.f32 %v291, 3.8918573e-05
    %v304 = vadd.f32 %v303, 0.001143296
    %v305 = vmul.f32 %v291, %v304
    %v306 = vadd.f32 %v305, 0.014752088
    %v307 = vmul.f32 %v291, %v306
    %v308 = vadd.f32 %v307, 0.112945676
    %v309 = vmul.f32 %v291, %v308
    %v310 = vadd.f32 %v309, 0.4994258
    %v311 = vmul.f32 %v291, %v310
    %v312 = vadd.f32 %v311, 1.0
    %v313 = vrcp.pop %v312
    %v314 = vmul.f32 %v312, %v313
    %v315 = vsub.f32 1.0, %v314
    %v316 = vmul.f32 %v313, %v315
    %v317 = vadd.f32 %v313, %v316
    %vm318 = vweird.f32 %v312
    %vm319 = vweird.f32 %v313
    %vm320 = vmor %vm318, %vm319
    %v321 = vsel %vm320, %v313, %v317
    %v322 = vand.u32 2147483647, %v312
    %vm323 = vcmp.eq.f32.partialorder %v322, 8.507059e+37
    %v324 = vand.u32 %v312, 2147483648
    %v325 = vor.u32 1.1754944e-38, %v324
    %v326 = vsel %vm323, %v325, %v321
    %v327 = vmul.f32 %v302, %v326
    %v328 = vmin.f32 %v327, 1.0
    %v329 = vmax.f32 %v328, -1.0
    %v330 = vmul.f32 %v283, %v283
    %v331 = vmin.f32 16.0, %v330
    %v332 = vmul.f32 %v331, 2.1237322e-06
    %v333 = vadd.f32 %v332, 0.00028619796
    %v334 = vmul.f32 %v331, %v333
    %v335 = vadd.f32 %v334, 0.0036580483
    %v336 = vmul.f32 %v331, %v335
    %v337 = vadd.f32 %v336, 0.05243302
    %v338 = vmul.f32 %v331, %v337
    %v339 = vadd.f32 %v338, 0.18741608
    %v340 = vmul.f32 %v331, %v339
    %v341 = vadd.f32 %v340, 1.1283791
    %v342 = vmul.f32 %v283, %v341
    %v343 = vmul.f32 %v331, 3.8918573e-05
    %v344 = vadd.f32 %v343, 0.001143296
    %v345 = vmul.f32 %v331, %v344
    %v346 = vadd.f32 %v345, 0.014752088
    %v347 = vmul.f32 %v331, %v346
    %v348 = vadd.f32 %v347, 0.112945676
    %v349 = vmul.f32 %v331, %v348
    %v350 = vadd.f32 %v349, 0.4994258
    %v351 = vmul.f32 %v331, %v350
    %v352 = vadd.f32 %v351, 1.0
    %v353 = vrcp.pop %v352
    %v354 = vmul.f32 %v352, %v353
    %v355 = vsub.f32 1.0, %v354
    %v356 = vmul.f32 %v353, %v355
    %v357 = vadd.f32 %v353, %v356
    %vm358 = vweird.f32 %v352
    %vm359 = vweird.f32 %v353
    %vm360 = vmor %vm358, %vm359
    %v361 = vsel %vm360, %v353, %v357
    %v362 = vand.u32 2147483647, %v352
    %vm363 = vcmp.eq.f32.partialorder %v362, 8.507059e+37
    %v364 = vand.u32 %v352, 2147483648
    %v365 = vor.u32 1.1754944e-38, %v364
    %v366 = vsel %vm363, %v365, %v361
    %v367 = vmul.f32 %v342, %v366
    %v368 = vmin.f32 %v367, 1.0
    %v369 = vmax.f32 %v368, -1.0
    %v370 = vmul.f32 %v284, %v284
    %v371 = vmin.f32 16.0, %v370
    %v372 = vmul.f32 %v371, 2.1237322e-06
    %v373 = vadd.f32 %v372, 0.00028619796
    %v374 = vmul.f32 %v371, %v373
    %v375 = vadd.f32 %v374, 0.0036580483
    %v376 = vmul.f32 %v371, %v375
    %v377 = vadd.f32 %v376, 0.05243302
    %v378 = vmul.f32 %v371, %v377
    %v379 = vadd.f32 %v378, 0.18741608
    %v380 = vmul.f32 %v371, %v379
    %v381 = vadd.f32 %v380, 1.1283791
    %v382 = vmul.f32 %v284, %v381
    %v383 = vmul.f32 %v371, 3.8918573e-05
    %v384 = vadd.f32 %v383, 0.001143296
    %v385 = vmul.f32 %v371, %v384
    %v386 = vadd.f32 %v385, 0.014752088
    %v387 = vmul.f32 %v371, %v386
    %v388 = vadd.f32 %v387, 0.112945676
    %v389 = vmul.f32 %v371, %v388
    %v390 = vadd.f32 %v389, 0.4994258
    %v391 = vmul.f32 %v371, %v390
    %v392 = vadd.f32 %v391, 1.0
    %v393 = vrcp.pop %v392
    %v394 = vmul.f32 %v392, %v393
    %v395 = vsub.f32 1.0, %v394
    %v396 = vmul.f32 %v393, %v395
    %v397 = vadd.f32 %v393, %v396
    %vm398 = vweird.f32 %v392
    %vm399 = vweird.f32 %v393
    %vm400 = vmor %vm398, %vm399
    %v401 = vsel %vm400, %v393, %v397
    %v402 = vand.u32 2147483647, %v392
    %vm403 = vcmp.eq.f32.partialorder %v402, 8.507059e+37
    %v404 = vand.u32 %v392, 2147483648
    %v405 = vor.u32 1.1754944e-38, %v404
    %v406 = vsel %vm403, %v405, %v401
    %v407 = vmul.f32 %v382, %v406
    %v408 = vmin.f32 %v407, 1.0
    %v409 = vmax.f32 %v408, -1.0
    %v410 = vmul.f32 %v285, %v285
    %v411 = vmin.f32 16.0, %v410
    %v412 = vmul.f32 %v411, 2.1237322e-06
    %v413 = vadd.f32 %v412, 0.00028619796
    %v414 = vmul.f32 %v411, %v413
    %v415 = vadd.f32 %v414, 0.0036580483
    %v416 = vmul.f32 %v411, %v415
    %v417 = vadd.f32 %v416, 0.05243302
    %v418 = vmul.f32 %v411, %v417
    %v419 = vadd.f32 %v418, 0.18741608
    %v420 = vmul.f32 %v411, %v419
    %v421 = vadd.f32 %v420, 1.1283791
    %v422 = vmul.f32 %v285, %v421
    %v423 = vmul.f32 %v411, 3.8918573e-05
    %v424 = vadd.f32 %v423, 0.001143296
    %v425 = vmul.f32 %v411, %v424
    %v426 = vadd.f32 %v425, 0.014752088
    %v427 = vmul.f32 %v411, %v426
    %v428 = vadd.f32 %v427, 0.112945676
    %v429 = vmul.f32 %v411, %v428
    %v430 = vadd.f32 %v429, 0.4994258
    %v431 = vmul.f32 %v411, %v430
    %v432 = vadd.f32 %v431, 1.0
    %v433 = vrcp.pop %v432
    %v434 = vmul.f32 %v432, %v433
    %v435 = vsub.f32 1.0, %v434
    %v436 = vmul.f32 %v433, %v435
    %v437 = vadd.f32 %v433, %v436
    %vm438 = vweird.f32 %v432
    %vm439 = vweird.f32 %v433
    %vm440 = vmor %vm438, %vm439
    %v441 = vsel %vm440, %v433, %v437
    %v442 = vand.u32 2147483647, %v432
    %vm443 = vcmp.eq.f32.partialorder %v442, 8.507059e+37
    %v444 = vand.u32 %v432, 2147483648
    %v445 = vor.u32 1.1754944e-38, %v444
    %v446 = vsel %vm443, %v445, %v441
    %v447 = vmul.f32 %v422, %v446
    %v448 = vmin.f32 %v447, 1.0
    %v449 = vmax.f32 %v448, -1.0
    %v450 = vmul.f32 %v286, %v286
    %v451 = vmin.f32 16.0, %v450
    %v452 = vmul.f32 %v451, 2.1237322e-06
    %v453 = vadd.f32 %v452, 0.00028619796
    %v454 = vmul.f32 %v451, %v453
    %v455 = vadd.f32 %v454, 0.0036580483
    %v456 = vmul.f32 %v451, %v455
    %v457 = vadd.f32 %v456, 0.05243302
    %v458 = vmul.f32 %v451, %v457
    %v459 = vadd.f32 %v458, 0.18741608
    %v460 = vmul.f32 %v451, %v459
    %v461 = vadd.f32 %v460, 1.1283791
    %v462 = vmul.f32 %v286, %v461
    %v463 = vmul.f32 %v451, 3.8918573e-05
    %v464 = vadd.f32 %v463, 0.001143296
    %v465 = vmul.f32 %v451, %v464
    %v466 = vadd.f32 %v465, 0.014752088
    %v467 = vmul.f32 %v451, %v466
    %v468 = vadd.f32 %v467, 0.112945676
    %v469 = vmul.f32 %v451, %v468
    %v470 = vadd.f32 %v469, 0.4994258
    %v471 = vmul.f32 %v451, %v470
    %v472 = vadd.f32 %v471, 1.0
    %v473 = vrcp.pop %v472
    %v474 = vmul.f32 %v472, %v473
    %v475 = vsub.f32 1.0, %v474
    %v476 = vmul.f32 %v473, %v475
    %v477 = vadd.f32 %v473, %v476
    %vm478 = vweird.f32 %v472
    %vm479 = vweird.f32 %v473
    %vm480 = vmor %vm478, %vm479
    %v481 = vsel %vm480, %v473, %v477
    %v482 = vand.u32 2147483647, %v472
    %vm483 = vcmp.eq.f32.partialorder %v482, 8.507059e+37
    %v484 = vand.u32 %v472, 2147483648
    %v485 = vor.u32 1.1754944e-38, %v484
    %v486 = vsel %vm483, %v485, %v481
    %v487 = vmul.f32 %v462, %v486
    %v488 = vmin.f32 %v487, 1.0
    %v489 = vmax.f32 %v488, -1.0
    %v490 = vmul.f32 %v287, %v287
    %v491 = vmin.f32 16.0, %v490
    %v492 = vmul.f32 %v491, 2.1237322e-06
    %v493 = vadd.f32 %v492, 0.00028619796
    %v494 = vmul.f32 %v491, %v493
    %v495 = vadd.f32 %v494, 0.0036580483
    %v496 = vmul.f32 %v491, %v495
    %v497 = vadd.f32 %v496, 0.05243302
    %v498 = vmul.f32 %v491, %v497
    %v499 = vadd.f32 %v498, 0.18741608
    %v500 = vmul.f32 %v491, %v499
    %v501 = vadd.f32 %v500, 1.1283791
    %v502 = vmul.f32 %v287, %v501
    %v503 = vmul.f32 %v491, 3.8918573e-05
    %v504 = vadd.f32 %v503, 0.001143296
    %v505 = vmul.f32 %v491, %v504
    %v506 = vadd.f32 %v505, 0.014752088
    %v507 = vmul.f32 %v491, %v506
    %v508 = vadd.f32 %v507, 0.112945676
    %v509 = vmul.f32 %v491, %v508
    %v510 = vadd.f32 %v509, 0.4994258
    %v511 = vmul.f32 %v491, %v510
    %v512 = vadd.f32 %v511, 1.0
    %v513 = vrcp.pop %v512
    %v514 = vmul.f32 %v512, %v513
    %v515 = vsub.f32 1.0, %v514
    %v516 = vmul.f32 %v513, %v515
    %v517 = vadd.f32 %v513, %v516
    %vm518 = vweird.f32 %v512
    %vm519 = vweird.f32 %v513
    %vm520 = vmor %vm518, %vm519
    %v521 = vsel %vm520, %v513, %v517
    %v522 = vand.u32 2147483647, %v512
    %vm523 = vcmp.eq.f32.partialorder %v522, 8.507059e+37
    %v524 = vand.u32 %v512, 2147483648
    %v525 = vor.u32 1.1754944e-38, %v524
    %v526 = vsel %vm523, %v525, %v521
    %v527 = vmul.f32 %v502, %v526
    %v528 = vmin.f32 %v527, 1.0
    %v529 = vmax.f32 %v528, -1.0
    %v530 = vmul.f32 %v288, %v288
    %v531 = vmin.f32 16.0, %v530
    %v532 = vmul.f32 %v531, 2.1237322e-06
    %v533 = vadd.f32 %v532, 0.00028619796
    %v534 = vmul.f32 %v531, %v533
    %v535 = vadd.f32 %v534, 0.0036580483
    %v536 = vmul.f32 %v531, %v535
    %v537 = vadd.f32 %v536, 0.05243302
    %v538 = vmul.f32 %v531, %v537
    %v539 = vadd.f32 %v538, 0.18741608
    %v540 = vmul.f32 %v531, %v539
    %v541 = vadd.f32 %v540, 1.1283791
    %v542 = vmul.f32 %v288, %v541
    %v543 = vmul.f32 %v531, 3.8918573e-05
    %v544 = vadd.f32 %v543, 0.001143296
    %v545 = vmul.f32 %v531, %v544
    %v546 = vadd.f32 %v545, 0.014752088
    %v547 = vmul.f32 %v531, %v546
    %v548 = vadd.f32 %v547, 0.112945676
    %v549 = vmul.f32 %v531, %v548
    %v550 = vadd.f32 %v549, 0.4994258
    %v551 = vmul.f32 %v531, %v550
    %v552 = vadd.f32 %v551, 1.0
    %v553 = vrcp.pop %v552
    %v554 = vmul.f32 %v552, %v553
    %v555 = vsub.f32 1.0, %v554
    %v556 = vmul.f32 %v553, %v555
    %v557 = vadd.f32 %v553, %v556
    %vm558 = vweird.f32 %v552
    %vm559 = vweird.f32 %v553
    %vm560 = vmor %vm558, %vm559
    %v561 = vsel %vm560, %v553, %v557
    %v562 = vand.u32 2147483647, %v552
    %vm563 = vcmp.eq.f32.partialorder %v562, 8.507059e+37
    %v564 = vand.u32 %v552, 2147483648
    %v565 = vor.u32 1.1754944e-38, %v564
    %v566 = vsel %vm563, %v565, %v561
    %v567 = vmul.f32 %v542, %v566
    %v568 = vmin.f32 %v567, 1.0
    %v569 = vmax.f32 %v568, -1.0
    %v570 = vmul.f32 %v289, %v289
    %v571 = vmin.f32 16.0, %v570
    %v572 = vmul.f32 %v571, 2.1237322e-06
    %v573 = vadd.f32 %v572, 0.00028619796
    %v574 = vmul.f32 %v571, %v573
    %v575 = vadd.f32 %v574, 0.0036580483
    %v576 = vmul.f32 %v571, %v575
    %v577 = vadd.f32 %v576, 0.05243302
    %v578 = vmul.f32 %v571, %v577
    %v579 = vadd.f32 %v578, 0.18741608
    %v580 = vmul.f32 %v571, %v579
    %v581 = vadd.f32 %v580, 1.1283791
    %v582 = vmul.f32 %v289, %v581
    %v583 = vmul.f32 %v571, 3.8918573e-05
    %v584 = vadd.f32 %v583, 0.001143296
    %v585 = vmul.f32 %v571, %v584
    %v586 = vadd.f32 %v585, 0.014752088
    %v587 = vmul.f32 %v571, %v586
    %v588 = vadd.f32 %v587, 0.112945676
    %v589 = vmul.f32 %v571, %v588
    %v590 = vadd.f32 %v589, 0.4994258
    %v591 = vmul.f32 %v571, %v590
    %v592 = vadd.f32 %v591, 1.0
    %v593 = vrcp.pop %v592
    %v594 = vmul.f32 %v592, %v593
    %v595 = vsub.f32 1.0, %v594
    %v596 = vmul.f32 %v593, %v595
    %v597 = vadd.f32 %v593, %v596
    %vm598 = vweird.f32 %v592
    %vm599 = vweird.f32 %v593
    %vm600 = vmor %vm598, %vm599
    %v601 = vsel %vm600, %v593, %v597
    %v602 = vand.u32 2147483647, %v592
    %vm603 = vcmp.eq.f32.partialorder %v602, 8.507059e+37
    %v604 = vand.u32 %v592, 2147483648
    %v605 = vor.u32 1.1754944e-38, %v604
    %v606 = vsel %vm603, %v605, %v601
    %v607 = vmul.f32 %v582, %v606
    %v608 = vmin.f32 %v607, 1.0
    %v609 = vmax.f32 %v608, -1.0
    %v610 = vadd.f32 %v329, 1.0
    %v611 = vadd.f32 %v369, 1.0
    %v612 = vadd.f32 %v409, 1.0
    %v613 = vadd.f32 %v449, 1.0
    %v614 = vadd.f32 %v489, 1.0
    %v615 = vadd.f32 %v529, 1.0
    %v616 = vadd.f32 %v569, 1.0
    %v617 = vadd.f32 %v609, 1.0
    %v618 = vmul.f32 %v274, %v610
    %v619 = vmul.f32 %v275, %v611
    %v620 = vmul.f32 %v276, %v612
    %v621 = vmul.f32 %v277, %v613
    %v622 = vmul.f32 %v278, %v614
    %v623 = vmul.f32 %v279, %v615
    %v624 = vmul.f32 %v280, %v616
    %v625 = vmul.f32 %v281, %v617
    %v626 = vpack.c.bf16 %v619, %v618
    %v627 = vpack.c.bf16 %v621, %v620
    %v628 = vpack.c.bf16 %v623, %v622
    %v629 = vpack.c.bf16 %v625, %v624
    %630 = vmatpush.bf16.msra.mxu0 0
    %631 = vmatpush.bf16.msra.mxu0 0
    %632 = vmatpush.bf16.msra.mxu0 0
    %633 = vmatpush.bf16.msra.mxu0 0
    %634 = vmatpush.bf16.msra.mxu0 %v629
    %635 = vmatpush.bf16.msra.mxu0 %v628
    %636 = vmatpush.bf16.msra.mxu0 %v627
    %637 = vmatpush.bf16.msra.mxu0 %v626
    %638 = vmatmul.bf16.gmra.mxu0 %v162
    %v639 = vpop.f32.mrf.mxu0
    %v640 = vadd.f32 0.0, %v639
    %v641 = vpop.f32.mrf.mxu0
    %v642 = vadd.f32 0.0, %v641
    %643 = vmatmul.bf16.gmra.mxu0 %v165
    %v644 = vpop.f32.mrf.mxu0
    %v645 = vadd.f32 0.0, %v644
    %v646 = vpop.f32.mrf.mxu0
    %v647 = vadd.f32 0.0, %v646
    %648 = vmatmul.bf16.gmra.mxu0 %v168
    %v649 = vpop.f32.mrf.mxu0
    %v650 = vadd.f32 0.0, %v649
    %v651 = vpop.f32.mrf.mxu0
    %v652 = vadd.f32 0.0, %v651
    %653 = vmatmul.bf16.gmra.mxu0 %v171
    %v654 = vpop.f32.mrf.mxu0
    %v655 = vadd.f32 0.0, %v654
    %v656 = vpop.f32.mrf.mxu0
    %v657 = vadd.f32 0.0, %v656
    %658 = vdwg.mxu0
    %v659 = vld [vmem:[#allocation5] sm:$0xff]
    %v660 = vld [vmem:[#allocation5 + $0x8] sm:$0xff]
    %v661 = vld [vmem:[#allocation5 + $0x10] sm:$0xff]
    %v662 = vld [vmem:[#allocation5 + $0x18] sm:$0xff]
    %v663 = vld [vmem:[#allocation5 + $0x20] sm:$0xff]
    %v664 = vld [vmem:[#allocation5 + $0x28] sm:$0xff]
    %v665 = vld [vmem:[#allocation5 + $0x30] sm:$0xff]
    %v666 = vld [vmem:[#allocation5 + $0x38] sm:$0xff]
    %v667 = vld [vmem:[#allocation5 + $0x40] sm:$0xff]
    %v668 = vld [vmem:[#allocation5 + $0x48] sm:$0xff]
    %v669 = vld [vmem:[#allocation5 + $0x50] sm:$0xff]
    %v670 = vld [vmem:[#allocation5 + $0x58] sm:$0xff]
    %v671 = vld [vmem:[#allocation5 + $0x60] sm:$0xff]
    %v672 = vld [vmem:[#allocation5 + $0x68] sm:$0xff]
    %v673 = vld [vmem:[#allocation5 + $0x70] sm:$0xff]
    %v674 = vld [vmem:[#allocation5 + $0x78] sm:$0xff]
    %v675 = vld [vmem:[%s5] sm:$0x1]
    %v677 = vperm.slane %v675, 0
    %679 = vmatpush.msra.mxu0 %v674
    %680 = vmatpush.msra.mxu0 %v673
    %681 = vmatpush.msra.mxu0 %v672
    %682 = vmatpush.msra.mxu0 %v671
    %683 = vmatpush.msra.mxu0 %v670
    %684 = vmatpush.msra.mxu0 %v669
    %685 = vmatpush.msra.mxu0 %v668
    %686 = vmatpush.msra.mxu0 %v667
    %687 = vmatpush.msra.mxu0 %v666
    %688 = vmatpush.msra.mxu0 %v665
    %689 = vmatpush.msra.mxu0 %v664
    %690 = vmatpush.msra.mxu0 %v663
    %691 = vmatpush.msra.mxu0 %v662
    %692 = vmatpush.msra.mxu0 %v661
    %693 = vmatpush.msra.mxu0 %v660
    %694 = vmatpush.msra.mxu0 %v659
    %695 = vmatmul.f32.gmra.mxu0 %v640
    %v696 = vpop.f32.mrf.mxu0
    %v697 = vadd.f32 %v677, %v696
    %698 = vmatmul.f32.gmra.mxu0 %v642
    %v699 = vpop.f32.mrf.mxu0
    %v700 = vadd.f32 %v677, %v699
    %701 = vmatmul.f32.gmra.mxu0 %v645
    %v702 = vpop.f32.mrf.mxu0
    %v703 = vadd.f32 %v677, %v702
    %704 = vmatmul.f32.gmra.mxu0 %v647
    %v705 = vpop.f32.mrf.mxu0
    %v706 = vadd.f32 %v677, %v705
    %707 = vmatmul.f32.gmra.mxu0 %v650
    %v708 = vpop.f32.mrf.mxu0
    %v709 = vadd.f32 %v677, %v708
    %710 = vmatmul.f32.gmra.mxu0 %v652
    %v711 = vpop.f32.mrf.mxu0
    %v712 = vadd.f32 %v677, %v711
    %713 = vmatmul.f32.gmra.mxu0 %v655
    %v714 = vpop.f32.mrf.mxu0
    %v715 = vadd.f32 %v677, %v714
    %716 = vmatmul.f32.gmra.mxu0 %v657
    %v717 = vpop.f32.mrf.mxu0
    %v718 = vadd.f32 %v677, %v717
    %719 = vdwg.mxu0
    %v720 = vmul.f32 %v697, 0.5
    %v721 = vmul.f32 %v700, 0.5
    %v722 = vmul.f32 %v703, 0.5
    %v723 = vmul.f32 %v706, 0.5
    %v724 = vmul.f32 %v709, 0.5
    %v725 = vmul.f32 %v712, 0.5
    %v726 = vmul.f32 %v715, 0.5
    %v727 = vmul.f32 %v718, 0.5
    %v728 = vmul.f32 %v697, 0.70710677
    %v729 = vmul.f32 %v700, 0.70710677
    %v730 = vmul.f32 %v703, 0.70710677
    %v731 = vmul.f32 %v706, 0.70710677
    %v732 = vmul.f32 %v709, 0.70710677
    %v733 = vmul.f32 %v712, 0.70710677
    %v734 = vmul.f32 %v715, 0.70710677
    %v735 = vmul.f32 %v718, 0.70710677
    %v736 = vmul.f32 %v728, %v728
    %v737 = vmin.f32 16.0, %v736
    %v738 = vmul.f32 %v737, 2.1237322e-06
    %v739 = vadd.f32 %v738, 0.00028619796
    %v740 = vmul.f32 %v737, %v739
    %v741 = vadd.f32 %v740, 0.0036580483
    %v742 = vmul.f32 %v737, %v741
    %v743 = vadd.f32 %v742, 0.05243302
    %v744 = vmul.f32 %v737, %v743
    %v745 = vadd.f32 %v744, 0.18741608
    %v746 = vmul.f32 %v737, %v745
    %v747 = vadd.f32 %v746, 1.1283791
    %v748 = vmul.f32 %v728, %v747
    %v749 = vmul.f32 %v737, 3.8918573e-05
    %v750 = vadd.f32 %v749, 0.001143296
    %v751 = vmul.f32 %v737, %v750
    %v752 = vadd.f32 %v751, 0.014752088
    %v753 = vmul.f32 %v737, %v752
    %v754 = vadd.f32 %v753, 0.112945676
    %v755 = vmul.f32 %v737, %v754
    %v756 = vadd.f32 %v755, 0.4994258
    %v757 = vmul.f32 %v737, %v756
    %v758 = vadd.f32 %v757, 1.0
    %v759 = vrcp.pop %v758
    %v760 = vmul.f32 %v758, %v759
    %v761 = vsub.f32 1.0, %v760
    %v762 = vmul.f32 %v759, %v761
    %v763 = vadd.f32 %v759, %v762
    %vm764 = vweird.f32 %v758
    %vm765 = vweird.f32 %v759
    %vm766 = vmor %vm764, %vm765
    %v767 = vsel %vm766, %v759, %v763
    %v768 = vand.u32 2147483647, %v758
    %vm769 = vcmp.eq.f32.partialorder %v768, 8.507059e+37
    %v770 = vand.u32 %v758, 2147483648
    %v771 = vor.u32 1.1754944e-38, %v770
    %v772 = vsel %vm769, %v771, %v767
    %v773 = vmul.f32 %v748, %v772
    %v774 = vmin.f32 %v773, 1.0
    %v775 = vmax.f32 %v774, -1.0
    %v776 = vmul.f32 %v729, %v729
    %v777 = vmin.f32 16.0, %v776
    %v778 = vmul.f32 %v777, 2.1237322e-06
    %v779 = vadd.f32 %v778, 0.00028619796
    %v780 = vmul.f32 %v777, %v779
    %v781 = vadd.f32 %v780, 0.0036580483
    %v782 = vmul.f32 %v777, %v781
    %v783 = vadd.f32 %v782, 0.05243302
    %v784 = vmul.f32 %v777, %v783
    %v785 = vadd.f32 %v784, 0.18741608
    %v786 = vmul.f32 %v777, %v785
    %v787 = vadd.f32 %v786, 1.1283791
    %v788 = vmul.f32 %v729, %v787
    %v789 = vmul.f32 %v777, 3.8918573e-05
    %v790 = vadd.f32 %v789, 0.001143296
    %v791 = vmul.f32 %v777, %v790
    %v792 = vadd.f32 %v791, 0.014752088
    %v793 = vmul.f32 %v777, %v792
    %v794 = vadd.f32 %v793, 0.112945676
    %v795 = vmul.f32 %v777, %v794
    %v796 = vadd.f32 %v795, 0.4994258
    %v797 = vmul.f32 %v777, %v796
    %v798 = vadd.f32 %v797, 1.0
    %v799 = vrcp.pop %v798
    %v800 = vmul.f32 %v798, %v799
    %v801 = vsub.f32 1.0, %v800
    %v802 = vmul.f32 %v799, %v801
    %v803 = vadd.f32 %v799, %v802
    %vm804 = vweird.f32 %v798
    %vm805 = vweird.f32 %v799
    %vm806 = vmor %vm804, %vm805
    %v807 = vsel %vm806, %v799, %v803
    %v808 = vand.u32 2147483647, %v798
    %vm809 = vcmp.eq.f32.partialorder %v808, 8.507059e+37
    %v810 = vand.u32 %v798, 2147483648
    %v811 = vor.u32 1.1754944e-38, %v810
    %v812 = vsel %vm809, %v811, %v807
    %v813 = vmul.f32 %v788, %v812
    %v814 = vmin.f32 %v813, 1.0
    %v815 = vmax.f32 %v814, -1.0
    %v816 = vmul.f32 %v730, %v730
    %v817 = vmin.f32 16.0, %v816
    %v818 = vmul.f32 %v817, 2.1237322e-06
    %v819 = vadd.f32 %v818, 0.00028619796
    %v820 = vmul.f32 %v817, %v819
    %v821 = vadd.f32 %v820, 0.0036580483
    %v822 = vmul.f32 %v817, %v821
    %v823 = vadd.f32 %v822, 0.05243302
    %v824 = vmul.f32 %v817, %v823
    %v825 = vadd.f32 %v824, 0.18741608
    %v826 = vmul.f32 %v817, %v825
    %v827 = vadd.f32 %v826, 1.1283791
    %v828 = vmul.f32 %v730, %v827
    %v829 = vmul.f32 %v817, 3.8918573e-05
    %v830 = vadd.f32 %v829, 0.001143296
    %v831 = vmul.f32 %v817, %v830
    %v832 = vadd.f32 %v831, 0.014752088
    %v833 = vmul.f32 %v817, %v832
    %v834 = vadd.f32 %v833, 0.112945676
    %v835 = vmul.f32 %v817, %v834
    %v836 = vadd.f32 %v835, 0.4994258
    %v837 = vmul.f32 %v817, %v836
    %v838 = vadd.f32 %v837, 1.0
    %v839 = vrcp.pop %v838
    %v840 = vmul.f32 %v838, %v839
    %v841 = vsub.f32 1.0, %v840
    %v842 = vmul.f32 %v839, %v841
    %v843 = vadd.f32 %v839, %v842
    %vm844 = vweird.f32 %v838
    %vm845 = vweird.f32 %v839
    %vm846 = vmor %vm844, %vm845
    %v847 = vsel %vm846, %v839, %v843
    %v848 = vand.u32 2147483647, %v838
    %vm849 = vcmp.eq.f32.partialorder %v848, 8.507059e+37
    %v850 = vand.u32 %v838, 2147483648
    %v851 = vor.u32 1.1754944e-38, %v850
    %v852 = vsel %vm849, %v851, %v847
    %v853 = vmul.f32 %v828, %v852
    %v854 = vmin.f32 %v853, 1.0
    %v855 = vmax.f32 %v854, -1.0
    %v856 = vmul.f32 %v731, %v731
    %v857 = vmin.f32 16.0, %v856
    %v858 = vmul.f32 %v857, 2.1237322e-06
    %v859 = vadd.f32 %v858, 0.00028619796
    %v860 = vmul.f32 %v857, %v859
    %v861 = vadd.f32 %v860, 0.0036580483
    %v862 = vmul.f32 %v857, %v861
    %v863 = vadd.f32 %v862, 0.05243302
    %v864 = vmul.f32 %v857, %v863
    %v865 = vadd.f32 %v864, 0.18741608
    %v866 = vmul.f32 %v857, %v865
    %v867 = vadd.f32 %v866, 1.1283791
    %v868 = vmul.f32 %v731, %v867
    %v869 = vmul.f32 %v857, 3.8918573e-05
    %v870 = vadd.f32 %v869, 0.001143296
    %v871 = vmul.f32 %v857, %v870
    %v872 = vadd.f32 %v871, 0.014752088
    %v873 = vmul.f32 %v857, %v872
    %v874 = vadd.f32 %v873, 0.112945676
    %v875 = vmul.f32 %v857, %v874
    %v876 = vadd.f32 %v875, 0.4994258
    %v877 = vmul.f32 %v857, %v876
    %v878 = vadd.f32 %v877, 1.0
    %v879 = vrcp.pop %v878
    %v880 = vmul.f32 %v878, %v879
    %v881 = vsub.f32 1.0, %v880
    %v882 = vmul.f32 %v879, %v881
    %v883 = vadd.f32 %v879, %v882
    %vm884 = vweird.f32 %v878
    %vm885 = vweird.f32 %v879
    %vm886 = vmor %vm884, %vm885
    %v887 = vsel %vm886, %v879, %v883
    %v888 = vand.u32 2147483647, %v878
    %vm889 = vcmp.eq.f32.partialorder %v888, 8.507059e+37
    %v890 = vand.u32 %v878, 2147483648
    %v891 = vor.u32 1.1754944e-38, %v890
    %v892 = vsel %vm889, %v891, %v887
    %v893 = vmul.f32 %v868, %v892
    %v894 = vmin.f32 %v893, 1.0
    %v895 = vmax.f32 %v894, -1.0
    %v896 = vmul.f32 %v732, %v732
    %v897 = vmin.f32 16.0, %v896
    %v898 = vmul.f32 %v897, 2.1237322e-06
    %v899 = vadd.f32 %v898, 0.00028619796
    %v900 = vmul.f32 %v897, %v899
    %v901 = vadd.f32 %v900, 0.0036580483
    %v902 = vmul.f32 %v897, %v901
    %v903 = vadd.f32 %v902, 0.05243302
    %v904 = vmul.f32 %v897, %v903
    %v905 = vadd.f32 %v904, 0.18741608
    %v906 = vmul.f32 %v897, %v905
    %v907 = vadd.f32 %v906, 1.1283791
    %v908 = vmul.f32 %v732, %v907
    %v909 = vmul.f32 %v897, 3.8918573e-05
    %v910 = vadd.f32 %v909, 0.001143296
    %v911 = vmul.f32 %v897, %v910
    %v912 = vadd.f32 %v911, 0.014752088
    %v913 = vmul.f32 %v897, %v912
    %v914 = vadd.f32 %v913, 0.112945676
    %v915 = vmul.f32 %v897, %v914
    %v916 = vadd.f32 %v915, 0.4994258
    %v917 = vmul.f32 %v897, %v916
    %v918 = vadd.f32 %v917, 1.0
    %v919 = vrcp.pop %v918
    %v920 = vmul.f32 %v918, %v919
    %v921 = vsub.f32 1.0, %v920
    %v922 = vmul.f32 %v919, %v921
    %v923 = vadd.f32 %v919, %v922
    %vm924 = vweird.f32 %v918
    %vm925 = vweird.f32 %v919
    %vm926 = vmor %vm924, %vm925
    %v927 = vsel %vm926, %v919, %v923
    %v928 = vand.u32 2147483647, %v918
    %vm929 = vcmp.eq.f32.partialorder %v928, 8.507059e+37
    %v930 = vand.u32 %v918, 2147483648
    %v931 = vor.u32 1.1754944e-38, %v930
    %v932 = vsel %vm929, %v931, %v927
    %v933 = vmul.f32 %v908, %v932
    %v934 = vmin.f32 %v933, 1.0
    %v935 = vmax.f32 %v934, -1.0
    %v936 = vmul.f32 %v733, %v733
    %v937 = vmin.f32 16.0, %v936
    %v938 = vmul.f32 %v937, 2.1237322e-06
    %v939 = vadd.f32 %v938, 0.00028619796
    %v940 = vmul.f32 %v937, %v939
    %v941 = vadd.f32 %v940, 0.0036580483
    %v942 = vmul.f32 %v937, %v941
    %v943 = vadd.f32 %v942, 0.05243302
    %v944 = vmul.f32 %v937, %v943
    %v945 = vadd.f32 %v944, 0.18741608
    %v946 = vmul.f32 %v937, %v945
    %v947 = vadd.f32 %v946, 1.1283791
    %v948 = vmul.f32 %v733, %v947
    %v949 = vmul.f32 %v937, 3.8918573e-05
    %v950 = vadd.f32 %v949, 0.001143296
    %v951 = vmul.f32 %v937, %v950
    %v952 = vadd.f32 %v951, 0.014752088
    %v953 = vmul.f32 %v937, %v952
    %v954 = vadd.f32 %v953, 0.112945676
    %v955 = vmul.f32 %v937, %v954
    %v956 = vadd.f32 %v955, 0.4994258
    %v957 = vmul.f32 %v937, %v956
    %v958 = vadd.f32 %v957, 1.0
    %v959 = vrcp.pop %v958
    %v960 = vmul.f32 %v958, %v959
    %v961 = vsub.f32 1.0, %v960
    %v962 = vmul.f32 %v959, %v961
    %v963 = vadd.f32 %v959, %v962
    %vm964 = vweird.f32 %v958
    %vm965 = vweird.f32 %v959
    %vm966 = vmor %vm964, %vm965
    %v967 = vsel %vm966, %v959, %v963
    %v968 = vand.u32 2147483647, %v958
    %vm969 = vcmp.eq.f32.partialorder %v968, 8.507059e+37
    %v970 = vand.u32 %v958, 2147483648
    %v971 = vor.u32 1.1754944e-38, %v970
    %v972 = vsel %vm969, %v971, %v967
    %v973 = vmul.f32 %v948, %v972
    %v974 = vmin.f32 %v973, 1.0
    %v975 = vmax.f32 %v974, -1.0
    %v976 = vmul.f32 %v734, %v734
    %v977 = vmin.f32 16.0, %v976
    %v978 = vmul.f32 %v977, 2.1237322e-06
    %v979 = vadd.f32 %v978, 0.00028619796
    %v980 = vmul.f32 %v977, %v979
    %v981 = vadd.f32 %v980, 0.0036580483
    %v982 = vmul.f32 %v977, %v981
    %v983 = vadd.f32 %v982, 0.05243302
    %v984 = vmul.f32 %v977, %v983
    %v985 = vadd.f32 %v984, 0.18741608
    %v986 = vmul.f32 %v977, %v985
    %v987 = vadd.f32 %v986, 1.1283791
    %v988 = vmul.f32 %v734, %v987
    %v989 = vmul.f32 %v977, 3.8918573e-05
    %v990 = vadd.f32 %v989, 0.001143296
    %v991 = vmul.f32 %v977, %v990
    %v992 = vadd.f32 %v991, 0.014752088
    %v993 = vmul.f32 %v977, %v992
    %v994 = vadd.f32 %v993, 0.112945676
    %v995 = vmul.f32 %v977, %v994
    %v996 = vadd.f32 %v995, 0.4994258
    %v997 = vmul.f32 %v977, %v996
    %v998 = vadd.f32 %v997, 1.0
    %v999 = vrcp.pop %v998
    %v1000 = vmul.f32 %v998, %v999
    %v1001 = vsub.f32 1.0, %v1000
    %v1002 = vmul.f32 %v999, %v1001
    %v1003 = vadd.f32 %v999, %v1002
    %vm1004 = vweird.f32 %v998
    %vm1005 = vweird.f32 %v999
    %vm1006 = vmor %vm1004, %vm1005
    %v1007 = vsel %vm1006, %v999, %v1003
    %v1008 = vand.u32 2147483647, %v998
    %vm1009 = vcmp.eq.f32.partialorder %v1008, 8.507059e+37
    %v1010 = vand.u32 %v998, 2147483648
    %v1011 = vor.u32 1.1754944e-38, %v1010
    %v1012 = vsel %vm1009, %v1011, %v1007
    %v1013 = vmul.f32 %v988, %v1012
    %v1014 = vmin.f32 %v1013, 1.0
    %v1015 = vmax.f32 %v1014, -1.0
    %v1016 = vmul.f32 %v735, %v735
    %v1017 = vmin.f32 16.0, %v1016
    %v1018 = vmul.f32 %v1017, 2.1237322e-06
    %v1019 = vadd.f32 %v1018, 0.00028619796
    %v1020 = vmul.f32 %v1017, %v1019
    %v1021 = vadd.f32 %v1020, 0.0036580483
    %v1022 = vmul.f32 %v1017, %v1021
    %v1023 = vadd.f32 %v1022, 0.05243302
    %v1024 = vmul.f32 %v1017, %v1023
    %v1025 = vadd.f32 %v1024, 0.18741608
    %v1026 = vmul.f32 %v1017, %v1025
    %v1027 = vadd.f32 %v1026, 1.1283791
    %v1028 = vmul.f32 %v735, %v1027
    %v1029 = vmul.f32 %v1017, 3.8918573e-05
    %v1030 = vadd.f32 %v1029, 0.001143296
    %v1031 = vmul.f32 %v1017, %v1030
    %v1032 = vadd.f32 %v1031, 0.014752088
    %v1033 = vmul.f32 %v1017, %v1032
    %v1034 = vadd.f32 %v1033, 0.112945676
    %v1035 = vmul.f32 %v1017, %v1034
    %v1036 = vadd.f32 %v1035, 0.4994258
    %v1037 = vmul.f32 %v1017, %v1036
    %v1038 = vadd.f32 %v1037, 1.0
    %v1039 = vrcp.pop %v1038
    %v1040 = vmul.f32 %v1038, %v1039
    %v1041 = vsub.f32 1.0, %v1040
    %v1042 = vmul.f32 %v1039, %v1041
    %v1043 = vadd.f32 %v1039, %v1042
    %vm1044 = vweird.f32 %v1038
    %vm1045 = vweird.f32 %v1039
    %vm1046 = vmor %vm1044, %vm1045
    %v1047 = vsel %vm1046, %v1039, %v1043
    %v1048 = vand.u32 2147483647, %v1038
    %vm1049 = vcmp.eq.f32.partialorder %v1048, 8.507059e+37
    %v1050 = vand.u32 %v1038, 2147483648
    %v1051 = vor.u32 1.1754944e-38, %v1050
    %v1052 = vsel %vm1049, %v1051, %v1047
    %v1053 = vmul.f32 %v1028, %v1052
    %v1054 = vmin.f32 %v1053, 1.0
    %v1055 = vmax.f32 %v1054, -1.0
    %v1056 = vadd.f32 %v775, 1.0
    %v1057 = vadd.f32 %v815, 1.0
    %v1058 = vadd.f32 %v855, 1.0
    %v1059 = vadd.f32 %v895, 1.0
    %v1060 = vadd.f32 %v935, 1.0
    %v1061 = vadd.f32 %v975, 1.0
    %v1062 = vadd.f32 %v1015, 1.0
    %v1063 = vadd.f32 %v1055, 1.0
    %v1064 = vmul.f32 %v720, %v1056
    %v1065 = vmul.f32 %v721, %v1057
    %v1066 = vmul.f32 %v722, %v1058
    %v1067 = vmul.f32 %v723, %v1059
    %v1068 = vmul.f32 %v724, %v1060
    %v1069 = vmul.f32 %v725, %v1061
    %v1070 = vmul.f32 %v726, %v1062
    %v1071 = vmul.f32 %v727, %v1063
    %v1072 = vpack.c.bf16 %v1065, %v1064
    %v1073 = vpack.c.bf16 %v1067, %v1066
    %v1074 = vpack.c.bf16 %v1069, %v1068
    %v1075 = vpack.c.bf16 %v1071, %v1070
    %1076 = vmatpush.bf16.msra.mxu0 0
    %1077 = vmatpush.bf16.msra.mxu0 0
    %1078 = vmatpush.bf16.msra.mxu0 0
    %1079 = vmatpush.bf16.msra.mxu0 0
    %1080 = vmatpush.bf16.msra.mxu0 %v1075
    %1081 = vmatpush.bf16.msra.mxu0 %v1074
    %1082 = vmatpush.bf16.msra.mxu0 %v1073
    %1083 = vmatpush.bf16.msra.mxu0 %v1072
    %1084 = vmatmul.bf16.gmra.mxu0 %v162
    %v1085 = vpop.f32.mrf.mxu0
    %v1086 = vadd.f32 0.0, %v1085
    %v1087 = vpop.f32.mrf.mxu0
    %v1088 = vadd.f32 0.0, %v1087
    %1089 = vmatmul.bf16.gmra.mxu0 %v165
    %v1090 = vpop.f32.mrf.mxu0
    %v1091 = vadd.f32 0.0, %v1090
    %v1092 = vpop.f32.mrf.mxu0
    %v1093 = vadd.f32 0.0, %v1092
    %1094 = vmatmul.bf16.gmra.mxu0 %v168
    %v1095 = vpop.f32.mrf.mxu0
    %v1096 = vadd.f32 0.0, %v1095
    %v1097 = vpop.f32.mrf.mxu0
    %v1098 = vadd.f32 0.0, %v1097
    %1099 = vmatmul.bf16.gmra.mxu0 %v171
    %v1100 = vpop.f32.mrf.mxu0
    %v1101 = vadd.f32 0.0, %v1100
    %v1102 = vpop.f32.mrf.mxu0
    %v1103 = vadd.f32 0.0, %v1102
    %1104 = vdwg.mxu0
    %v1105 = vld [vmem:[#allocation7] sm:$0xff]
    %v1106 = vld [vmem:[#allocation7 + $0x8] sm:$0xff]
    %v1107 = vld [vmem:[#allocation7 + $0x10] sm:$0xff]
    %v1108 = vld [vmem:[#allocation7 + $0x18] sm:$0xff]
    %v1109 = vld [vmem:[#allocation7 + $0x20] sm:$0xff]
    %v1110 = vld [vmem:[#allocation7 + $0x28] sm:$0xff]
    %v1111 = vld [vmem:[#allocation7 + $0x30] sm:$0xff]
    %v1112 = vld [vmem:[#allocation7 + $0x38] sm:$0xff]
    %v1113 = vld [vmem:[#allocation7 + $0x40] sm:$0xff]
    %v1114 = vld [vmem:[#allocation7 + $0x48] sm:$0xff]
    %v1115 = vld [vmem:[#allocation7 + $0x50] sm:$0xff]
    %v1116 = vld [vmem:[#allocation7 + $0x58] sm:$0xff]
    %v1117 = vld [vmem:[#allocation7 + $0x60] sm:$0xff]
    %v1118 = vld [vmem:[#allocation7 + $0x68] sm:$0xff]
    %v1119 = vld [vmem:[#allocation7 + $0x70] sm:$0xff]
    %v1120 = vld [vmem:[#allocation7 + $0x78] sm:$0xff]
    %v1121 = vld [vmem:[%s7] sm:$0x1]
    %v1123 = vperm.slane %v1121, 0
    %1125 = vmatpush.msra.mxu0 %v1120
    %1126 = vmatpush.msra.mxu0 %v1119
    %1127 = vmatpush.msra.mxu0 %v1118
    %1128 = vmatpush.msra.mxu0 %v1117
    %1129 = vmatpush.msra.mxu0 %v1116
    %1130 = vmatpush.msra.mxu0 %v1115
    %1131 = vmatpush.msra.mxu0 %v1114
    %1132 = vmatpush.msra.mxu0 %v1113
    %1133 = vmatpush.msra.mxu0 %v1112
    %1134 = vmatpush.msra.mxu0 %v1111
    %1135 = vmatpush.msra.mxu0 %v1110
    %1136 = vmatpush.msra.mxu0 %v1109
    %1137 = vmatpush.msra.mxu0 %v1108
    %1138 = vmatpush.msra.mxu0 %v1107
    %1139 = vmatpush.msra.mxu0 %v1106
    %1140 = vmatpush.msra.mxu0 %v1105
    %1141 = vmatmul.f32.gmra.mxu0 %v1086
    %v1142 = vpop.f32.mrf.mxu0
    %v1143 = vadd.f32 %v1123, %v1142
    %1144 = vmatmul.f32.gmra.mxu0 %v1088
    %v1145 = vpop.f32.mrf.mxu0
    %v1146 = vadd.f32 %v1123, %v1145
    %1147 = vmatmul.f32.gmra.mxu0 %v1091
    %v1148 = vpop.f32.mrf.mxu0
    %v1149 = vadd.f32 %v1123, %v1148
    %1150 = vmatmul.f32.gmra.mxu0 %v1093
    %v1151 = vpop.f32.mrf.mxu0
    %v1152 = vadd.f32 %v1123, %v1151
    %1153 = vmatmul.f32.gmra.mxu0 %v1096
    %v1154 = vpop.f32.mrf.mxu0
    %v1155 = vadd.f32 %v1123, %v1154
    %1156 = vmatmul.f32.gmra.mxu0 %v1098
    %v1157 = vpop.f32.mrf.mxu0
    %v1158 = vadd.f32 %v1123, %v1157
    %1159 = vmatmul.f32.gmra.mxu0 %v1101
    %v1160 = vpop.f32.mrf.mxu0
    %v1161 = vadd.f32 %v1123, %v1160
    %1162 = vmatmul.f32.gmra.mxu0 %v1103
    %v1163 = vpop.f32.mrf.mxu0
    %v1164 = vadd.f32 %v1123, %v1163
    %1165 = vdwg.mxu0
    %v1166 = vmul.f32 %v1143, 0.5
    %v1167 = vmul.f32 %v1146, 0.5
    %v1168 = vmul.f32 %v1149, 0.5
    %v1169 = vmul.f32 %v1152, 0.5
    %v1170 = vmul.f32 %v1155, 0.5
    %v1171 = vmul.f32 %v1158, 0.5
    %v1172 = vmul.f32 %v1161, 0.5
    %v1173 = vmul.f32 %v1164, 0.5
    %v1174 = vmul.f32 %v1143, 0.70710677
    %v1175 = vmul.f32 %v1146, 0.70710677
    %v1176 = vmul.f32 %v1149, 0.70710677
    %v1177 = vmul.f32 %v1152, 0.70710677
    %v1178 = vmul.f32 %v1155, 0.70710677
    %v1179 = vmul.f32 %v1158, 0.70710677
    %v1180 = vmul.f32 %v1161, 0.70710677
    %v1181 = vmul.f32 %v1164, 0.70710677
    %v1182 = vmul.f32 %v1174, %v1174
    %v1183 = vmin.f32 16.0, %v1182
    %v1184 = vmul.f32 %v1183, 2.1237322e-06
    %v1185 = vadd.f32 %v1184, 0.00028619796
    %v1186 = vmul.f32 %v1183, %v1185
    %v1187 = vadd.f32 %v1186, 0.0036580483
    %v1188 = vmul.f32 %v1183, %v1187
    %v1189 = vadd.f32 %v1188, 0.05243302
    %v1190 = vmul.f32 %v1183, %v1189
    %v1191 = vadd.f32 %v1190, 0.18741608
    %v1192 = vmul.f32 %v1183, %v1191
    %v1193 = vadd.f32 %v1192, 1.1283791
    %v1194 = vmul.f32 %v1174, %v1193
    %v1195 = vmul.f32 %v1183, 3.8918573e-05
    %v1196 = vadd.f32 %v1195, 0.001143296
    %v1197 = vmul.f32 %v1183, %v1196
    %v1198 = vadd.f32 %v1197, 0.014752088
    %v1199 = vmul.f32 %v1183, %v1198
    %v1200 = vadd.f32 %v1199, 0.112945676
    %v1201 = vmul.f32 %v1183, %v1200
    %v1202 = vadd.f32 %v1201, 0.4994258
    %v1203 = vmul.f32 %v1183, %v1202
    %v1204 = vadd.f32 %v1203, 1.0
    %v1205 = vrcp.pop %v1204
    %v1206 = vmul.f32 %v1204, %v1205
    %v1207 = vsub.f32 1.0, %v1206
    %v1208 = vmul.f32 %v1205, %v1207
    %v1209 = vadd.f32 %v1205, %v1208
    %vm1210 = vweird.f32 %v1204
    %vm1211 = vweird.f32 %v1205
    %vm1212 = vmor %vm1210, %vm1211
    %v1213 = vsel %vm1212, %v1205, %v1209
    %v1214 = vand.u32 2147483647, %v1204
    %vm1215 = vcmp.eq.f32.partialorder %v1214, 8.507059e+37
    %v1216 = vand.u32 %v1204, 2147483648
    %v1217 = vor.u32 1.1754944e-38, %v1216
    %v1218 = vsel %vm1215, %v1217, %v1213
    %v1219 = vmul.f32 %v1194, %v1218
    %v1220 = vmin.f32 %v1219, 1.0
    %v1221 = vmax.f32 %v1220, -1.0
    %v1222 = vmul.f32 %v1175, %v1175
    %v1223 = vmin.f32 16.0, %v1222
    %v1224 = vmul.f32 %v1223, 2.1237322e-06
    %v1225 = vadd.f32 %v1224, 0.00028619796
    %v1226 = vmul.f32 %v1223, %v1225
    %v1227 = vadd.f32 %v1226, 0.0036580483
    %v1228 = vmul.f32 %v1223, %v1227
    %v1229 = vadd.f32 %v1228, 0.05243302
    %v1230 = vmul.f32 %v1223, %v1229
    %v1231 = vadd.f32 %v1230, 0.18741608
    %v1232 = vmul.f32 %v1223, %v1231
    %v1233 = vadd.f32 %v1232, 1.1283791
    %v1234 = vmul.f32 %v1175, %v1233
    %v1235 = vmul.f32 %v1223, 3.8918573e-05
    %v1236 = vadd.f32 %v1235, 0.001143296
    %v1237 = vmul.f32 %v1223, %v1236
    %v1238 = vadd.f32 %v1237, 0.014752088
    %v1239 = vmul.f32 %v1223, %v1238
    %v1240 = vadd.f32 %v1239, 0.112945676
    %v1241 = vmul.f32 %v1223, %v1240
    %v1242 = vadd.f32 %v1241, 0.4994258
    %v1243 = vmul.f32 %v1223, %v1242
    %v1244 = vadd.f32 %v1243, 1.0
    %v1245 = vrcp.pop %v1244
    %v1246 = vmul.f32 %v1244, %v1245
    %v1247 = vsub.f32 1.0, %v1246
    %v1248 = vmul.f32 %v1245, %v1247
    %v1249 = vadd.f32 %v1245, %v1248
    %vm1250 = vweird.f32 %v1244
    %vm1251 = vweird.f32 %v1245
    %vm1252 = vmor %vm1250, %vm1251
    %v1253 = vsel %vm1252, %v1245, %v1249
    %v1254 = vand.u32 2147483647, %v1244
    %vm1255 = vcmp.eq.f32.partialorder %v1254, 8.507059e+37
    %v1256 = vand.u32 %v1244, 2147483648
    %v1257 = vor.u32 1.1754944e-38, %v1256
    %v1258 = vsel %vm1255, %v1257, %v1253
    %v1259 = vmul.f32 %v1234, %v1258
    %v1260 = vmin.f32 %v1259, 1.0
    %v1261 = vmax.f32 %v1260, -1.0
    %v1262 = vmul.f32 %v1176, %v1176
    %v1263 = vmin.f32 16.0, %v1262
    %v1264 = vmul.f32 %v1263, 2.1237322e-06
    %v1265 = vadd.f32 %v1264, 0.00028619796
    %v1266 = vmul.f32 %v1263, %v1265
    %v1267 = vadd.f32 %v1266, 0.0036580483
    %v1268 = vmul.f32 %v1263, %v1267
    %v1269 = vadd.f32 %v1268, 0.05243302
    %v1270 = vmul.f32 %v1263, %v1269
    %v1271 = vadd.f32 %v1270, 0.18741608
    %v1272 = vmul.f32 %v1263, %v1271
    %v1273 = vadd.f32 %v1272, 1.1283791
    %v1274 = vmul.f32 %v1176, %v1273
    %v1275 = vmul.f32 %v1263, 3.8918573e-05
    %v1276 = vadd.f32 %v1275, 0.001143296
    %v1277 = vmul.f32 %v1263, %v1276
    %v1278 = vadd.f32 %v1277, 0.014752088
    %v1279 = vmul.f32 %v1263, %v1278
    %v1280 = vadd.f32 %v1279, 0.112945676
    %v1281 = vmul.f32 %v1263, %v1280
    %v1282 = vadd.f32 %v1281, 0.4994258
    %v1283 = vmul.f32 %v1263, %v1282
    %v1284 = vadd.f32 %v1283, 1.0
    %v1285 = vrcp.pop %v1284
    %v1286 = vmul.f32 %v1284, %v1285
    %v1287 = vsub.f32 1.0, %v1286
    %v1288 = vmul.f32 %v1285, %v1287
    %v1289 = vadd.f32 %v1285, %v1288
    %vm1290 = vweird.f32 %v1284
    %vm1291 = vweird.f32 %v1285
    %vm1292 = vmor %vm1290, %vm1291
    %v1293 = vsel %vm1292, %v1285, %v1289
    %v1294 = vand.u32 2147483647, %v1284
    %vm1295 = vcmp.eq.f32.partialorder %v1294, 8.507059e+37
    %v1296 = vand.u32 %v1284, 2147483648
    %v1297 = vor.u32 1.1754944e-38, %v1296
    %v1298 = vsel %vm1295, %v1297, %v1293
    %v1299 = vmul.f32 %v1274, %v1298
    %v1300 = vmin.f32 %v1299, 1.0
    %v1301 = vmax.f32 %v1300, -1.0
    %v1302 = vmul.f32 %v1177, %v1177
    %v1303 = vmin.f32 16.0, %v1302
    %v1304 = vmul.f32 %v1303, 2.1237322e-06
    %v1305 = vadd.f32 %v1304, 0.00028619796
    %v1306 = vmul.f32 %v1303, %v1305
    %v1307 = vadd.f32 %v1306, 0.0036580483
    %v1308 = vmul.f32 %v1303, %v1307
    %v1309 = vadd.f32 %v1308, 0.05243302
    %v1310 = vmul.f32 %v1303, %v1309
    %v1311 = vadd.f32 %v1310, 0.18741608
    %v1312 = vmul.f32 %v1303, %v1311
    %v1313 = vadd.f32 %v1312, 1.1283791
    %v1314 = vmul.f32 %v1177, %v1313
    %v1315 = vmul.f32 %v1303, 3.8918573e-05
    %v1316 = vadd.f32 %v1315, 0.001143296
    %v1317 = vmul.f32 %v1303, %v1316
    %v1318 = vadd.f32 %v1317, 0.014752088
    %v1319 = vmul.f32 %v1303, %v1318
    %v1320 = vadd.f32 %v1319, 0.112945676
    %v1321 = vmul.f32 %v1303, %v1320
    %v1322 = vadd.f32 %v1321, 0.4994258
    %v1323 = vmul.f32 %v1303, %v1322
    %v1324 = vadd.f32 %v1323, 1.0
    %v1325 = vrcp.pop %v1324
    %v1326 = vmul.f32 %v1324, %v1325
    %v1327 = vsub.f32 1.0, %v1326
    %v1328 = vmul.f32 %v1325, %v1327
    %v1329 = vadd.f32 %v1325, %v1328
    %vm1330 = vweird.f32 %v1324
    %vm1331 = vweird.f32 %v1325
    %vm1332 = vmor %vm1330, %vm1331
    %v1333 = vsel %vm1332, %v1325, %v1329
    %v1334 = vand.u32 2147483647, %v1324
    %vm1335 = vcmp.eq.f32.partialorder %v1334, 8.507059e+37
    %v1336 = vand.u32 %v1324, 2147483648
    %v1337 = vor.u32 1.1754944e-38, %v1336
    %v1338 = vsel %vm1335, %v1337, %v1333
    %v1339 = vmul.f32 %v1314, %v1338
    %v1340 = vmin.f32 %v1339, 1.0
    %v1341 = vmax.f32 %v1340, -1.0
    %v1342 = vmul.f32 %v1178, %v1178
    %v1343 = vmin.f32 16.0, %v1342
    %v1344 = vmul.f32 %v1343, 2.1237322e-06
    %v1345 = vadd.f32 %v1344, 0.00028619796
    %v1346 = vmul.f32 %v1343, %v1345
    %v1347 = vadd.f32 %v1346, 0.0036580483
    %v1348 = vmul.f32 %v1343, %v1347
    %v1349 = vadd.f32 %v1348, 0.05243302
    %v1350 = vmul.f32 %v1343, %v1349
    %v1351 = vadd.f32 %v1350, 0.18741608
    %v1352 = vmul.f32 %v1343, %v1351
    %v1353 = vadd.f32 %v1352, 1.1283791
    %v1354 = vmul.f32 %v1178, %v1353
    %v1355 = vmul.f32 %v1343, 3.8918573e-05
    %v1356 = vadd.f32 %v1355, 0.001143296
    %v1357 = vmul.f32 %v1343, %v1356
    %v1358 = vadd.f32 %v1357, 0.014752088
    %v1359 = vmul.f32 %v1343, %v1358
    %v1360 = vadd.f32 %v1359, 0.112945676
    %v1361 = vmul.f32 %v1343, %v1360
    %v1362 = vadd.f32 %v1361, 0.4994258
    %v1363 = vmul.f32 %v1343, %v1362
    %v1364 = vadd.f32 %v1363, 1.0
    %v1365 = vrcp.pop %v1364
    %v1366 = vmul.f32 %v1364, %v1365
    %v1367 = vsub.f32 1.0, %v1366
    %v1368 = vmul.f32 %v1365, %v1367
    %v1369 = vadd.f32 %v1365, %v1368
    %vm1370 = vweird.f32 %v1364
    %vm1371 = vweird.f32 %v1365
    %vm1372 = vmor %vm1370, %vm1371
    %v1373 = vsel %vm1372, %v1365, %v1369
    %v1374 = vand.u32 2147483647, %v1364
    %vm1375 = vcmp.eq.f32.partialorder %v1374, 8.507059e+37
    %v1376 = vand.u32 %v1364, 2147483648
    %v1377 = vor.u32 1.1754944e-38, %v1376
    %v1378 = vsel %vm1375, %v1377, %v1373
    %v1379 = vmul.f32 %v1354, %v1378
    %v1380 = vmin.f32 %v1379, 1.0
    %v1381 = vmax.f32 %v1380, -1.0
    %v1382 = vmul.f32 %v1179, %v1179
    %v1383 = vmin.f32 16.0, %v1382
    %v1384 = vmul.f32 %v1383, 2.1237322e-06
    %v1385 = vadd.f32 %v1384, 0.00028619796
    %v1386 = vmul.f32 %v1383, %v1385
    %v1387 = vadd.f32 %v1386, 0.0036580483
    %v1388 = vmul.f32 %v1383, %v1387
    %v1389 = vadd.f32 %v1388, 0.05243302
    %v1390 = vmul.f32 %v1383, %v1389
    %v1391 = vadd.f32 %v1390, 0.18741608
    %v1392 = vmul.f32 %v1383, %v1391
    %v1393 = vadd.f32 %v1392, 1.1283791
    %v1394 = vmul.f32 %v1179, %v1393
    %v1395 = vmul.f32 %v1383, 3.8918573e-05
    %v1396 = vadd.f32 %v1395, 0.001143296
    %v1397 = vmul.f32 %v1383, %v1396
    %v1398 = vadd.f32 %v1397, 0.014752088
    %v1399 = vmul.f32 %v1383, %v1398
    %v1400 = vadd.f32 %v1399, 0.112945676
    %v1401 = vmul.f32 %v1383, %v1400
    %v1402 = vadd.f32 %v1401, 0.4994258
    %v1403 = vmul.f32 %v1383, %v1402
    %v1404 = vadd.f32 %v1403, 1.0
    %v1405 = vrcp.pop %v1404
    %v1406 = vmul.f32 %v1404, %v1405
    %v1407 = vsub.f32 1.0, %v1406
    %v1408 = vmul.f32 %v1405, %v1407
    %v1409 = vadd.f32 %v1405, %v1408
    %vm1410 = vweird.f32 %v1404
    %vm1411 = vweird.f32 %v1405
    %vm1412 = vmor %vm1410, %vm1411
    %v1413 = vsel %vm1412, %v1405, %v1409
    %v1414 = vand.u32 2147483647, %v1404
    %vm1415 = vcmp.eq.f32.partialorder %v1414, 8.507059e+37
    %v1416 = vand.u32 %v1404, 2147483648
    %v1417 = vor.u32 1.1754944e-38, %v1416
    %v1418 = vsel %vm1415, %v1417, %v1413
    %v1419 = vmul.f32 %v1394, %v1418
    %v1420 = vmin.f32 %v1419, 1.0
    %v1421 = vmax.f32 %v1420, -1.0
    %v1422 = vmul.f32 %v1180, %v1180
    %v1423 = vmin.f32 16.0, %v1422
    %v1424 = vmul.f32 %v1423, 2.1237322e-06
    %v1425 = vadd.f32 %v1424, 0.00028619796
    %v1426 = vmul.f32 %v1423, %v1425
    %v1427 = vadd.f32 %v1426, 0.0036580483
    %v1428 = vmul.f32 %v1423, %v1427
    %v1429 = vadd.f32 %v1428, 0.05243302
    %v1430 = vmul.f32 %v1423, %v1429
    %v1431 = vadd.f32 %v1430, 0.18741608
    %v1432 = vmul.f32 %v1423, %v1431
    %v1433 = vadd.f32 %v1432, 1.1283791
    %v1434 = vmul.f32 %v1180, %v1433
    %v1435 = vmul.f32 %v1423, 3.8918573e-05
    %v1436 = vadd.f32 %v1435, 0.001143296
    %v1437 = vmul.f32 %v1423, %v1436
    %v1438 = vadd.f32 %v1437, 0.014752088
    %v1439 = vmul.f32 %v1423, %v1438
    %v1440 = vadd.f32 %v1439, 0.112945676
    %v1441 = vmul.f32 %v1423, %v1440
    %v1442 = vadd.f32 %v1441, 0.4994258
    %v1443 = vmul.f32 %v1423, %v1442
    %v1444 = vadd.f32 %v1443, 1.0
    %v1445 = vrcp.pop %v1444
    %v1446 = vmul.f32 %v1444, %v1445
    %v1447 = vsub.f32 1.0, %v1446
    %v1448 = vmul.f32 %v1445, %v1447
    %v1449 = vadd.f32 %v1445, %v1448
    %vm1450 = vweird.f32 %v1444
    %vm1451 = vweird.f32 %v1445
    %vm1452 = vmor %vm1450, %vm1451
    %v1453 = vsel %vm1452, %v1445, %v1449
    %v1454 = vand.u32 2147483647, %v1444
    %vm1455 = vcmp.eq.f32.partialorder %v1454, 8.507059e+37
    %v1456 = vand.u32 %v1444, 2147483648
    %v1457 = vor.u32 1.1754944e-38, %v1456
    %v1458 = vsel %vm1455, %v1457, %v1453
    %v1459 = vmul.f32 %v1434, %v1458
    %v1460 = vmin.f32 %v1459, 1.0
    %v1461 = vmax.f32 %v1460, -1.0
    %v1462 = vmul.f32 %v1181, %v1181
    %v1463 = vmin.f32 16.0, %v1462
    %v1464 = vmul.f32 %v1463, 2.1237322e-06
    %v1465 = vadd.f32 %v1464, 0.00028619796
    %v1466 = vmul.f32 %v1463, %v1465
    %v1467 = vadd.f32 %v1466, 0.0036580483
    %v1468 = vmul.f32 %v1463, %v1467
    %v1469 = vadd.f32 %v1468, 0.05243302
    %v1470 = vmul.f32 %v1463, %v1469
    %v1471 = vadd.f32 %v1470, 0.18741608
    %v1472 = vmul.f32 %v1463, %v1471
    %v1473 = vadd.f32 %v1472, 1.1283791
    %v1474 = vmul.f32 %v1181, %v1473
    %v1475 = vmul.f32 %v1463, 3.8918573e-05
    %v1476 = vadd.f32 %v1475, 0.001143296
    %v1477 = vmul.f32 %v1463, %v1476
    %v1478 = vadd.f32 %v1477, 0.014752088
    %v1479 = vmul.f32 %v1463, %v1478
    %v1480 = vadd.f32 %v1479, 0.112945676
    %v1481 = vmul.f32 %v1463, %v1480
    %v1482 = vadd.f32 %v1481, 0.4994258
    %v1483 = vmul.f32 %v1463, %v1482
    %v1484 = vadd.f32 %v1483, 1.0
    %v1485 = vrcp.pop %v1484
    %v1486 = vmul.f32 %v1484, %v1485
    %v1487 = vsub.f32 1.0, %v1486
    %v1488 = vmul.f32 %v1485, %v1487
    %v1489 = vadd.f32 %v1485, %v1488
    %vm1490 = vweird.f32 %v1484
    %vm1491 = vweird.f32 %v1485
    %vm1492 = vmor %vm1490, %vm1491
    %v1493 = vsel %vm1492, %v1485, %v1489
    %v1494 = vand.u32 2147483647, %v1484
    %vm1495 = vcmp.eq.f32.partialorder %v1494, 8.507059e+37
    %v1496 = vand.u32 %v1484, 2147483648
    %v1497 = vor.u32 1.1754944e-38, %v1496
    %v1498 = vsel %vm1495, %v1497, %v1493
    %v1499 = vmul.f32 %v1474, %v1498
    %v1500 = vmin.f32 %v1499, 1.0
    %v1501 = vmax.f32 %v1500, -1.0
    %v1502 = vadd.f32 %v1221, 1.0
    %v1503 = vadd.f32 %v1261, 1.0
    %v1504 = vadd.f32 %v1301, 1.0
    %v1505 = vadd.f32 %v1341, 1.0
    %v1506 = vadd.f32 %v1381, 1.0
    %v1507 = vadd.f32 %v1421, 1.0
    %v1508 = vadd.f32 %v1461, 1.0
    %v1509 = vadd.f32 %v1501, 1.0
    %v1510 = vmul.f32 %v1166, %v1502
    %v1511 = vmul.f32 %v1167, %v1503
    %v1512 = vmul.f32 %v1168, %v1504
    %v1513 = vmul.f32 %v1169, %v1505
    %v1514 = vmul.f32 %v1170, %v1506
    %v1515 = vmul.f32 %v1171, %v1507
    %v1516 = vmul.f32 %v1172, %v1508
    %v1517 = vmul.f32 %v1173, %v1509
    %v1518 = vpack.c.bf16 %v1511, %v1510
    %v1519 = vpack.c.bf16 %v1513, %v1512
    %v1520 = vpack.c.bf16 %v1515, %v1514
    %v1521 = vpack.c.bf16 %v1517, %v1516
    %1522 = vmatpush.bf16.msra.mxu0 0
    %1523 = vmatpush.bf16.msra.mxu0 0
    %1524 = vmatpush.bf16.msra.mxu0 0
    %1525 = vmatpush.bf16.msra.mxu0 0
    %1526 = vmatpush.bf16.msra.mxu0 %v1521
    %1527 = vmatpush.bf16.msra.mxu0 %v1520
    %1528 = vmatpush.bf16.msra.mxu0 %v1519
    %1529 = vmatpush.bf16.msra.mxu0 %v1518
    %1530 = vmatmul.bf16.gmra.mxu0 %v162
    %v1531 = vpop.f32.mrf.mxu0
    %v1532 = vadd.f32 0.0, %v1531
    %v1533 = vpop.f32.mrf.mxu0
    %v1534 = vadd.f32 0.0, %v1533
    %1535 = vmatmul.bf16.gmra.mxu0 %v165
    %v1536 = vpop.f32.mrf.mxu0
    %v1537 = vadd.f32 0.0, %v1536
    %v1538 = vpop.f32.mrf.mxu0
    %v1539 = vadd.f32 0.0, %v1538
    %1540 = vmatmul.bf16.gmra.mxu0 %v168
    %v1541 = vpop.f32.mrf.mxu0
    %v1542 = vadd.f32 0.0, %v1541
    %v1543 = vpop.f32.mrf.mxu0
    %v1544 = vadd.f32 0.0, %v1543
    %1545 = vmatmul.bf16.gmra.mxu0 %v171
    %v1546 = vpop.f32.mrf.mxu0
    %v1547 = vadd.f32 0.0, %v1546
    %v1548 = vpop.f32.mrf.mxu0
    %v1549 = vadd.f32 0.0, %v1548
    %1550 = vdwg.mxu0
    %v1551 = vld [vmem:[#allocation8] sm:$0xff]
    %v1552 = vld [vmem:[#allocation8 + $0x8] sm:$0xff]
    %v1553 = vld [vmem:[#allocation8 + $0x10] sm:$0xff]
    %v1554 = vld [vmem:[#allocation8 + $0x18] sm:$0xff]
    %v1555 = vld [vmem:[#allocation8 + $0x20] sm:$0xff]
    %v1556 = vld [vmem:[#allocation8 + $0x28] sm:$0xff]
    %v1557 = vld [vmem:[#allocation8 + $0x30] sm:$0xff]
    %v1558 = vld [vmem:[#allocation8 + $0x38] sm:$0xff]
    %v1559 = vld [vmem:[#allocation8 + $0x40] sm:$0xff]
    %v1560 = vld [vmem:[#allocation8 + $0x48] sm:$0xff]
    %v1561 = vld [vmem:[#allocation8 + $0x50] sm:$0xff]
    %v1562 = vld [vmem:[#allocation8 + $0x58] sm:$0xff]
    %v1563 = vld [vmem:[#allocation8 + $0x60] sm:$0xff]
    %v1564 = vld [vmem:[#allocation8 + $0x68] sm:$0xff]
    %v1565 = vld [vmem:[#allocation8 + $0x70] sm:$0xff]
    %v1566 = vld [vmem:[#allocation8 + $0x78] sm:$0xff]
    %v1567 = vld [vmem:[%s9] sm:$0x1]
    %v1569 = vperm.slane %v1567, 0
    %1571 = vmatpush.msra.mxu0 %v1566
    %1572 = vmatpush.msra.mxu0 %v1565
    %1573 = vmatpush.msra.mxu0 %v1564
    %1574 = vmatpush.msra.mxu0 %v1563
    %1575 = vmatpush.msra.mxu0 %v1562
    %1576 = vmatpush.msra.mxu0 %v1561
    %1577 = vmatpush.msra.mxu0 %v1560
    %1578 = vmatpush.msra.mxu0 %v1559
    %1579 = vmatpush.msra.mxu0 %v1558
    %1580 = vmatpush.msra.mxu0 %v1557
    %1581 = vmatpush.msra.mxu0 %v1556
    %1582 = vmatpush.msra.mxu0 %v1555
    %1583 = vmatpush.msra.mxu0 %v1554
    %1584 = vmatpush.msra.mxu0 %v1553
    %1585 = vmatpush.msra.mxu0 %v1552
    %1586 = vmatpush.msra.mxu0 %v1551
    %1587 = vmatmul.f32.gmra.mxu0 %v1532
    %v1588 = vpop.f32.mrf.mxu0
    %v1589 = vadd.f32 %v1569, %v1588
    %1590 = vmatmul.f32.gmra.mxu0 %v1534
    %v1591 = vpop.f32.mrf.mxu0
    %v1592 = vadd.f32 %v1569, %v1591
    %1593 = vmatmul.f32.gmra.mxu0 %v1537
    %v1594 = vpop.f32.mrf.mxu0
    %v1595 = vadd.f32 %v1569, %v1594
    %1596 = vmatmul.f32.gmra.mxu0 %v1539
    %v1597 = vpop.f32.mrf.mxu0
    %v1598 = vadd.f32 %v1569, %v1597
    %1599 = vmatmul.f32.gmra.mxu0 %v1542
    %v1600 = vpop.f32.mrf.mxu0
    %v1601 = vadd.f32 %v1569, %v1600
    %1602 = vmatmul.f32.gmra.mxu0 %v1544
    %v1603 = vpop.f32.mrf.mxu0
    %v1604 = vadd.f32 %v1569, %v1603
    %1605 = vmatmul.f32.gmra.mxu0 %v1547
    %v1606 = vpop.f32.mrf.mxu0
    %v1607 = vadd.f32 %v1569, %v1606
    %1608 = vmatmul.f32.gmra.mxu0 %v1549
    %v1609 = vpop.f32.mrf.mxu0
    %v1610 = vadd.f32 %v1569, %v1609
    %1611 = vdwg.mxu0
    %1612 = vmax.xlane.f32.xlu0 %v1589
    %v1613 = vpop.xlane.xlu0 %1612
    %1614 = vmax.xlane.f32.xlu0 %v1592
    %v1615 = vpop.xlane.xlu0 %1614
    %1616 = vmax.xlane.f32.xlu0 %v1595
    %v1617 = vpop.xlane.xlu0 %1616
    %1618 = vmax.xlane.f32.xlu0 %v1598
    %v1619 = vpop.xlane.xlu0 %1618
    %1620 = vmax.xlane.f32.xlu0 %v1601
    %v1621 = vpop.xlane.xlu0 %1620
    %1622 = vmax.xlane.f32.xlu0 %v1604
    %v1623 = vpop.xlane.xlu0 %1622
    %1624 = vmax.xlane.f32.xlu0 %v1607
    %v1625 = vpop.xlane.xlu0 %1624
    %1626 = vmax.xlane.f32.xlu0 %v1610
    %v1627 = vpop.xlane.xlu0 %1626
    %v1628 = vsub.f32 %v1589, %v1613
    %v1629 = vsub.f32 %v1592, %v1615
    %v1630 = vsub.f32 %v1595, %v1617
    %v1631 = vsub.f32 %v1598, %v1619
    %v1632 = vsub.f32 %v1601, %v1621
    %v1633 = vsub.f32 %v1604, %v1623
    %v1634 = vsub.f32 %v1607, %v1625
    %v1635 = vsub.f32 %v1610, %v1627
    %v1636 = vmul.f32 %v1628, 1.442695
    %v1637 = vpow.pop %v1636
    %v1638 = vmul.f32 %v1629, 1.442695
    %v1639 = vpow.pop %v1638
    %v1640 = vmul.f32 %v1630, 1.442695
    %v1641 = vpow.pop %v1640
    %v1642 = vmul.f32 %v1631, 1.442695
    %v1643 = vpow.pop %v1642
    %v1644 = vmul.f32 %v1632, 1.442695
    %v1645 = vpow.pop %v1644
    %v1646 = vmul.f32 %v1633, 1.442695
    %v1647 = vpow.pop %v1646
    %v1648 = vmul.f32 %v1634, 1.442695
    %v1649 = vpow.pop %v1648
    %v1650 = vmul.f32 %v1635, 1.442695
    %v1651 = vpow.pop %v1650
    %1652 = vadd.xlane.f32.xlu0 %v1637
    %v1653 = vpop.xlane.xlu0 %1652
    %1654 = vadd.xlane.f32.xlu0 %v1639
    %v1655 = vpop.xlane.xlu0 %1654
    %1656 = vadd.xlane.f32.xlu0 %v1641
    %v1657 = vpop.xlane.xlu0 %1656
    %1658 = vadd.xlane.f32.xlu0 %v1643
    %v1659 = vpop.xlane.xlu0 %1658
    %1660 = vadd.xlane.f32.xlu0 %v1645
    %v1661 = vpop.xlane.xlu0 %1660
    %1662 = vadd.xlane.f32.xlu0 %v1647
    %v1663 = vpop.xlane.xlu0 %1662
    %1664 = vadd.xlane.f32.xlu0 %v1649
    %v1665 = vpop.xlane.xlu0 %1664
    %1666 = vadd.xlane.f32.xlu0 %v1651
    %v1667 = vpop.xlane.xlu0 %1666
    %v1668 = vlog2.pop %v1653
    %v1669 = vmul.f32 %v1668, 0.6931472
    %v1670 = vlog2.pop %v1655
    %v1671 = vmul.f32 %v1670, 0.6931472
    %v1672 = vlog2.pop %v1657
    %v1673 = vmul.f32 %v1672, 0.6931472
    %v1674 = vlog2.pop %v1659
    %v1675 = vmul.f32 %v1674, 0.6931472
    %v1676 = vlog2.pop %v1661
    %v1677 = vmul.f32 %v1676, 0.6931472
    %v1678 = vlog2.pop %v1663
    %v1679 = vmul.f32 %v1678, 0.6931472
    %v1680 = vlog2.pop %v1665
    %v1681 = vmul.f32 %v1680, 0.6931472
    %v1682 = vlog2.pop %v1667
    %v1683 = vmul.f32 %v1682, 0.6931472
    %v1684 = vsub.f32 %v1628, %v1669
    %v1685 = vsub.f32 %v1629, %v1671
    %v1686 = vsub.f32 %v1630, %v1673
    %v1687 = vsub.f32 %v1631, %v1675
    %v1688 = vsub.f32 %v1632, %v1677
    %v1689 = vsub.f32 %v1633, %v1679
    %v1690 = vsub.f32 %v1634, %v1681
    %v1691 = vsub.f32 %v1635, %v1683
    %1692 = vst [vmem:[#allocation10] sm:$0xff] %v1684
    %1693 = vst [vmem:[#allocation10 + $0x8] sm:$0xff] %v1685
    %1694 = vst [vmem:[#allocation10 + $0x10] sm:$0xff] %v1686
    %1695 = vst [vmem:[#allocation10 + $0x18] sm:$0xff] %v1687
    %1696 = vst [vmem:[#allocation10 + $0x20] sm:$0xff] %v1688
    %1697 = vst [vmem:[#allocation10 + $0x28] sm:$0xff] %v1689
    %1698 = vst [vmem:[#allocation10 + $0x30] sm:$0xff] %v1690
    %1699 = vst [vmem:[#allocation10 + $0x38] sm:$0xff] %v1691
    // Predicated region
    $region58: #{tpu_custom_call.1} parent=1 // pred_check
      _
    $region59: #{tpu_custom_call.1} parent=1 // pred_check_branch
      %1701 = sbr.rel (0) target = $region61
    $region60: #{tpu_custom_call.1} parent=1 // pred_region
      %1703 = vsyncadd [#allocation4], 0
      %s1704 = sshll.u32 [#allocation10], 4
      %s1705 = int_to_ptr.vmem [resolvable:$true] %s1704
      %s1706 = sshll.u32 %s10, 4
      %s1707 = int_to_ptr.hbm [resolvable:$true] %s1706
      %1712 = dma.vmem_to_hbm [thread:$0]  %s1705, 1024, %s1707, [#allocation4], 128, 128, 8
    $region61: #{tpu_custom_call.1} parent=1 // pred_fallthru
      _
    // Predicated region
    $region62: #{tpu_custom_call.1} parent=1 // pred_check
      _
    $region63: #{tpu_custom_call.1} parent=1 // pred_check_branch
      %1714 = sbr.rel (0) target = $region65
    $region64: #{tpu_custom_call.1} parent=1 // pred_region
      %1716 = dma.done [#allocation4], 1024
    $region65: #{tpu_custom_call.1} parent=1 // pred_fallthru
      _
    %1717 = vsyncpa [#allocation3], 1
    %1718 = vsyncpa [#allocation6], 1
    %1719 = vsyncpa [#allocation9], 1
    %1720 = vsyncpa [#allocation4], 1

</llo_original>
